<compile_context>
chip_gen: v5e
topology: v5e:2x2
jax: 0.10.0
libtpu: 0.0.40
codegen_flags: <defaults>
</compile_context>

<pallas_src>
import functools

import jax
import jax.numpy as jnp
from jax.experimental import pallas as pl
from jax.experimental.pallas import tpu as pltpu


def _mha_kernel(x_ref, lat_ref, wq_ref, wk_ref, wv_ref, wu_ref, bu_ref,
                o_ref, acc_ref, *, heads, dim_head, scale, compute_dtype):
    bs, groups, group_len, input_dim = x_ref.shape
    _, n_latents, q_in_dim = lat_ref.shape
    hd = heads * dim_head
    bg = bs * groups

    # ---- Projections: one fat MXU matmul each over all flattened tokens. ----
    x_tok = x_ref[...].reshape(bs * groups * group_len, input_dim).astype(compute_dtype)
    lat_tok = lat_ref[...].reshape(groups * n_latents, q_in_dim).astype(compute_dtype)

    k = jnp.dot(x_tok, wk_ref[...].astype(compute_dtype),
                preferred_element_type=jnp.float32)           # [bs*groups*group_len, hd]
    v = jnp.dot(x_tok, wv_ref[...].astype(compute_dtype),
                preferred_element_type=jnp.float32)
    q = jnp.dot(lat_tok, wq_ref[...].astype(compute_dtype),
                preferred_element_type=jnp.float32)           # [groups*n_latents, hd]

    # Merge (bs, groups) into one batch dim; broadcast queries over bs.
    # (Leading-dim reshapes / broadcasts do not touch the (8,128) tile layout.)
    k = k.astype(compute_dtype).reshape(bg, group_len, hd)
    v = v.astype(compute_dtype).reshape(bg, group_len, hd)
    q = jnp.broadcast_to(
        q.astype(compute_dtype).reshape(1, groups, n_latents, hd),
        (bs, groups, n_latents, hd)).reshape(bg, n_latents, hd)

    # ---- Per-head attention (heads is a small static constant -> unrolled). ----
    for h in range(heads):
        sl = slice(h * dim_head, (h + 1) * dim_head)
        qh = q[:, :, sl]                                       # [bg, n_latents, d]
        kh = k[:, :, sl]                                       # [bg, group_len, d]
        vh = v[:, :, sl]
        # Contract dim_head directly: no materialized transpose of K.
        s = jnp.einsum('bqd,bkd->bqk', qh, kh,
                       preferred_element_type=jnp.float32) * scale   # [bg, nl, n]
        s = s - jnp.max(s, axis=-1, keepdims=True)
        p = jnp.exp(s)
        inv = pl.reciprocal(jnp.sum(p, axis=-1, keepdims=True), approx=True)
        att = (p * inv).astype(compute_dtype)
        # Write this head's output into its static lane slice of the scratch
        # (instead of a concatenate chain).
        acc_ref[:, :, sl] = jnp.einsum('bqk,bkd->bqd', att, vh,
                                       preferred_element_type=jnp.float32)

    # ---- unify_heads: one fat matmul over all output tokens, plus bias. ----
    out = acc_ref[...].reshape(bg * n_latents, hd).astype(compute_dtype)
    out = jnp.dot(out, wu_ref[...].astype(compute_dtype),
                  preferred_element_type=jnp.float32)
    out = out + bu_ref[...].astype(jnp.float32)
    o_ref[...] = out.reshape(o_ref.shape).astype(o_ref.dtype)


def multi_head_cross_attention(x, latents, wq, wk, wv, wu, bu, *, heads,
                               compute_dtype=jnp.float32):
    bs, groups, group_len, input_dim = x.shape
    g2, n_latents, q_in_dim = latents.shape
    assert g2 == groups
    hd = wq.shape[1]                         # heads * dim_head
    assert hd % heads == 0
    dim_head = hd // heads
    scale = dim_head ** (-0.5)
    out_dim = wu.shape[1]

    kernel = functools.partial(
        _mha_kernel, heads=heads, dim_head=dim_head, scale=scale,
        compute_dtype=compute_dtype)

    def full(a):
        nd = a.ndim
        return pl.BlockSpec(a.shape, lambda i, _nd=nd: (0,) * _nd)

    return pl.pallas_call(
        kernel,
        out_shape=jax.ShapeDtypeStruct((bs, groups, n_latents, out_dim), x.dtype),
        grid_spec=pltpu.PrefetchScalarGridSpec(
            num_scalar_prefetch=0,
            # Single fused step: everything (a few tens of KiB) is VMEM-resident,
            # so we pay per-step pipeline overhead exactly once.
            grid=(1,),
            in_specs=[full(x), full(latents), full(wq), full(wk), full(wv),
                      full(wu), full(bu)],
            out_specs=pl.BlockSpec((bs, groups, n_latents, out_dim),
                                   lambda i: (0, 0, 0, 0)),
            scratch_shapes=[
                pltpu.VMEM((bs * groups, n_latents, hd), jnp.float32)],
        ),
        # Single step -> nothing to shard. At production bs, reintroduce a
        # 'parallel' batch grid axis (>= 2x num_cores steps of non-trivial
        # work) so v7x megacore can split along bs.
        compiler_params=pltpu.CompilerParams(
            dimension_semantics=("arbitrary",)),
    )(x, latents, wq, wk, wv, wu, bu)


def multi_head_cross_attention_ref(x, latents, wq, wk, wv, wu, bu, *, heads):
    # Pure-JAX reference mirroring the PyTorch semantics (latents broadcast over bs).
    bs, groups, n, _ = x.shape
    _, nl, _ = latents.shape
    hd = wq.shape[1]
    dim_head = hd // heads
    scale = dim_head ** (-0.5)

    k = x @ wk
    v = x @ wv
    q = latents @ wq
    k = k.reshape(bs, groups, n, heads, dim_head).transpose(0, 1, 3, 2, 4)
    v = v.reshape(bs, groups, n, heads, dim_head).transpose(0, 1, 3, 2, 4)
    q = q.reshape(groups, nl, heads, dim_head).transpose(0, 2, 1, 3)

    dot = jnp.einsum('ghnd,bghkd->bghnk', q, k) * scale
    att = jax.nn.softmax(dot, axis=-1)
    out = jnp.einsum('bghnk,bghkd->bghnd', att, v)
    out = out.transpose(0, 1, 3, 2, 4).reshape(bs, groups, nl, hd)
    return out @ wu + bu


if __name__ == "__main__":
    # Small, deterministic shapes consistent with MultiHeadAttention(cross_attn=True).
    bs, groups, group_len, input_dim = 2, 2, 16, 8
    heads, dim_head = 4, 8
    latent_dim = heads * dim_head          # 32 (cross_attn => latent_dim = dim_head*heads)
    n_latents = 8

    key = jax.random.PRNGKey(0)
    kx, kl, k1, k2, k3, k4, k5 = jax.random.split(key, 7)

    x = jax.random.normal(kx, (bs, groups, group_len, input_dim), jnp.float32)
    latents = jax.random.normal(kl, (groups, n_latents, latent_dim), jnp.float32)

    # Deterministic parameter init ([in, out] layout).
    wq = 0.1 * jax.random.normal(k1, (latent_dim, heads * dim_head), jnp.float32)
    wk = 0.1 * jax.random.normal(k2, (input_dim, heads * dim_head), jnp.float32)
    wv = 0.1 * jax.random.normal(k3, (input_dim, heads * dim_head), jnp.float32)
    wu = 0.1 * jax.random.normal(k4, (heads * dim_head, latent_dim), jnp.float32)
    bu = 0.1 * jax.random.normal(k5, (1, latent_dim), jnp.float32)

    ref = multi_head_cross_attention_ref(x, latents, wq, wk, wv, wu, bu, heads=heads)

    # f32 compute path (tolerance allows the approx EUP reciprocal).
    out = multi_head_cross_attention(x, latents, wq, wk, wv, wu, bu, heads=heads)
    out = jax.block_until_ready(out)
    assert out.shape == (bs, groups, n_latents, latent_dim)
    assert jnp.allclose(out, ref, atol=2e-3, rtol=2e-3), "f32 kernel mismatch vs reference"

    # bf16 MXU-input path (v5e-friendly), f32 accumulation; looser tolerance.
    out_bf16 = multi_head_cross_attention(x, latents, wq, wk, wv, wu, bu,
                                          heads=heads, compute_dtype=jnp.bfloat16)
    out_bf16 = jax.block_until_ready(out_bf16)
    assert jnp.allclose(out_bf16, ref, atol=5e-2, rtol=5e-2), "bf16 kernel mismatch vs reference"

    print("KERNEL_OK")
</pallas_src>

<mosaic_0001>
module attributes {stable_mosaic.version = 11 : i64} {
  func.func @_mha_kernel(%arg0: i32, %arg1: memref<2x2x16x8xf32, #tpu.memory_space<vmem>>, %arg2: memref<2x8x32xf32, #tpu.memory_space<vmem>>, %arg3: memref<32x32xf32, #tpu.memory_space<vmem>>, %arg4: memref<8x32xf32, #tpu.memory_space<vmem>>, %arg5: memref<8x32xf32, #tpu.memory_space<vmem>>, %arg6: memref<32x32xf32, #tpu.memory_space<vmem>>, %arg7: memref<1x32xf32, #tpu.memory_space<vmem>>, %arg8: memref<2x2x8x32xf32, #tpu.memory_space<vmem>>, %arg9: memref<4x8x32xf32, #tpu.memory_space<vmem>>) attributes {dimension_semantics = [#tpu.dimension_semantics<arbitrary>], iteration_bounds = array<i64: 1>, scalar_prefetch = 0 : i64, scratch_operands = 1 : i64, tpu.core_type = #tpu.core_type<tc>, window_params = [{pipeline_mode = #tpu.pipeline_mode<synchronous>, transform_indices = @transform_0, window_bounds = array<i64: 2, 2, 16, 8>}, {pipeline_mode = #tpu.pipeline_mode<synchronous>, transform_indices = @transform_1, window_bounds = array<i64: 2, 8, 32>}, {pipeline_mode = #tpu.pipeline_mode<synchronous>, transform_indices = @transform_2, window_bounds = array<i64: 32, 32>}, {pipeline_mode = #tpu.pipeline_mode<synchronous>, transform_indices = @transform_3, window_bounds = array<i64: 8, 32>}, {pipeline_mode = #tpu.pipeline_mode<synchronous>, transform_indices = @transform_4, window_bounds = array<i64: 8, 32>}, {pipeline_mode = #tpu.pipeline_mode<synchronous>, transform_indices = @transform_5, window_bounds = array<i64: 32, 32>}, {pipeline_mode = #tpu.pipeline_mode<synchronous>, transform_indices = @transform_6, window_bounds = array<i64: 1, 32>}, {pipeline_mode = #tpu.pipeline_mode<synchronous>, transform_indices = @transform_7, window_bounds = array<i64: 2, 2, 8, 32>}]} {
    %c0 = arith.constant 0 : index
    %c0_0 = arith.constant 0 : index
    %c0_1 = arith.constant 0 : index
    %c0_2 = arith.constant 0 : index
    %0 = vector.load %arg1[%c0, %c0_0, %c0_1, %c0_2] : memref<2x2x16x8xf32, #tpu.memory_space<vmem>>, vector<2x2x16x8xf32>
    %1 = vector.shape_cast %0 : vector<2x2x16x8xf32> to vector<64x8xf32>
    %c0_3 = arith.constant 0 : index
    %c0_4 = arith.constant 0 : index
    %c0_5 = arith.constant 0 : index
    %2 = vector.load %arg2[%c0_3, %c0_4, %c0_5] : memref<2x8x32xf32, #tpu.memory_space<vmem>>, vector<2x8x32xf32>
    %3 = vector.shape_cast %2 : vector<2x8x32xf32> to vector<16x32xf32>
    %c0_6 = arith.constant 0 : index
    %c0_7 = arith.constant 0 : index
    %4 = vector.load %arg4[%c0_6, %c0_7] : memref<8x32xf32, #tpu.memory_space<vmem>>, vector<8x32xf32>
    %cst = arith.constant dense<0.000000e+00> : vector<64x32xf32>
    %5 = tpu.matmul %1, %4, %cst {dimension_numbers = #tpu.dot_dimension_numbers<[1], [0], [0], [1], [0, 0, 1, 1], [], []>} : vector<64x8xf32>, vector<8x32xf32>, vector<64x32xf32> -> vector<64x32xf32>
    %c0_8 = arith.constant 0 : index
    %c0_9 = arith.constant 0 : index
    %6 = vector.load %arg5[%c0_8, %c0_9] : memref<8x32xf32, #tpu.memory_space<vmem>>, vector<8x32xf32>
    %cst_10 = arith.constant dense<0.000000e+00> : vector<64x32xf32>
    %7 = tpu.matmul %1, %6, %cst_10 {dimension_numbers = #tpu.dot_dimension_numbers<[1], [0], [0], [1], [0, 0, 1, 1], [], []>} : vector<64x8xf32>, vector<8x32xf32>, vector<64x32xf32> -> vector<64x32xf32>
    %c0_11 = arith.constant 0 : index
    %c0_12 = arith.constant 0 : index
    %8 = vector.load %arg3[%c0_11, %c0_12] : memref<32x32xf32, #tpu.memory_space<vmem>>, vector<32x32xf32>
    %cst_13 = arith.constant dense<0.000000e+00> : vector<16x32xf32>
    %9 = tpu.matmul %3, %8, %cst_13 {dimension_numbers = #tpu.dot_dimension_numbers<[1], [0], [0], [1], [0, 0, 1, 1], [], []>} : vector<16x32xf32>, vector<32x32xf32>, vector<16x32xf32> -> vector<16x32xf32>
    %10 = vector.shape_cast %5 : vector<64x32xf32> to vector<4x16x32xf32>
    %11 = vector.shape_cast %7 : vector<64x32xf32> to vector<4x16x32xf32>
    %12 = vector.shape_cast %9 : vector<16x32xf32> to vector<1x2x8x32xf32>
    %13 = vector.shape_cast %12 : vector<1x2x8x32xf32> to vector<1x2x8x32xf32>
    %14 = vector.broadcast %13 : vector<1x2x8x32xf32> to vector<2x2x8x32xf32>
    %15 = vector.shape_cast %14 : vector<2x2x8x32xf32> to vector<4x8x32xf32>
    %16 = vector.extract_strided_slice %15 {offsets = [0, 0, 0], sizes = [4, 8, 8], strides = [1, 1, 1]} : vector<4x8x32xf32> to vector<4x8x8xf32>
    %17 = vector.extract_strided_slice %10 {offsets = [0, 0, 0], sizes = [4, 16, 8], strides = [1, 1, 1]} : vector<4x16x32xf32> to vector<4x16x8xf32>
    %18 = vector.extract_strided_slice %11 {offsets = [0, 0, 0], sizes = [4, 16, 8], strides = [1, 1, 1]} : vector<4x16x32xf32> to vector<4x16x8xf32>
    "tpu.trace_start"() <{level = 10 : i32, message = "bqd,bkd->bqk"}> : () -> ()
    %cst_14 = arith.constant dense<0.000000e+00> : vector<4x8x16xf32>
    %19 = tpu.matmul %16, %17, %cst_14 {dimension_numbers = #tpu.dot_dimension_numbers<[2], [2], [1], [1], [0, 0, 0, 1, 1, 1], [0], [0]>} : vector<4x8x8xf32>, vector<4x16x8xf32>, vector<4x8x16xf32> -> vector<4x8x16xf32>
    "tpu.trace_stop"() : () -> ()
    %cst_15 = arith.constant 0.353553385 : f32
    %20 = vector.broadcast %cst_15 : f32 to vector<4x8x16xf32>
    %21 = arith.mulf %19, %20 : vector<4x8x16xf32>
    %cst_16 = arith.constant dense<0xFF800000> : vector<4x8xf32>
    %22 = vector.multi_reduction <maximumf>, %21, %cst_16 [2] : vector<4x8x16xf32> to vector<4x8xf32>
    %23 = vector.shape_cast %22 : vector<4x8xf32> to vector<4x8x1xf32>
    %24 = vector.broadcast %23 : vector<4x8x1xf32> to vector<4x8x16xf32>
    %25 = arith.subf %21, %24 : vector<4x8x16xf32>
    %26 = math.exp %25 : vector<4x8x16xf32>
    %cst_17 = arith.constant dense<0.000000e+00> : vector<4x8xf32>
    %27 = vector.multi_reduction <add>, %26, %cst_17 [2] : vector<4x8x16xf32> to vector<4x8xf32>
    %28 = vector.shape_cast %27 : vector<4x8xf32> to vector<4x8x1xf32>
    %29 = tpu.reciprocal %28 {approx = true} : vector<4x8x1xf32> -> vector<4x8x1xf32>
    %30 = vector.broadcast %29 : vector<4x8x1xf32> to vector<4x8x16xf32>
    %31 = arith.mulf %26, %30 : vector<4x8x16xf32>
    "tpu.trace_start"() <{level = 10 : i32, message = "bqk,bkd->bqd"}> : () -> ()
    %cst_18 = arith.constant dense<0.000000e+00> : vector<4x8x8xf32>
    %32 = tpu.matmul %31, %18, %cst_18 {dimension_numbers = #tpu.dot_dimension_numbers<[2], [1], [1], [2], [0, 0, 0, 1, 1, 2], [0], [0]>} : vector<4x8x16xf32>, vector<4x16x8xf32>, vector<4x8x8xf32> -> vector<4x8x8xf32>
    "tpu.trace_stop"() : () -> ()
    %c0_19 = arith.constant 0 : index
    %c0_20 = arith.constant 0 : index
    %c0_21 = arith.constant 0 : index
    %33 = vector.load %arg9[%c0_19, %c0_20, %c0_21] : memref<4x8x32xf32, #tpu.memory_space<vmem>>, vector<4x8x8xf32>
    tpu.vector_store %arg9[%c0_19, %c0_20, %c0_21], %32 {strides = array<i32>} : memref<4x8x32xf32, #tpu.memory_space<vmem>>, vector<4x8x8xf32>,
    %34 = vector.extract_strided_slice %15 {offsets = [0, 0, 8], sizes = [4, 8, 8], strides = [1, 1, 1]} : vector<4x8x32xf32> to vector<4x8x8xf32>
    %35 = vector.extract_strided_slice %10 {offsets = [0, 0, 8], sizes = [4, 16, 8], strides = [1, 1, 1]} : vector<4x16x32xf32> to vector<4x16x8xf32>
    %36 = vector.extract_strided_slice %11 {offsets = [0, 0, 8], sizes = [4, 16, 8], strides = [1, 1, 1]} : vector<4x16x32xf32> to vector<4x16x8xf32>
    "tpu.trace_start"() <{level = 10 : i32, message = "bqd,bkd->bqk"}> : () -> ()
    %cst_22 = arith.constant dense<0.000000e+00> : vector<4x8x16xf32>
    %37 = tpu.matmul %34, %35, %cst_22 {dimension_numbers = #tpu.dot_dimension_numbers<[2], [2], [1], [1], [0, 0, 0, 1, 1, 1], [0], [0]>} : vector<4x8x8xf32>, vector<4x16x8xf32>, vector<4x8x16xf32> -> vector<4x8x16xf32>
    "tpu.trace_stop"() : () -> ()
    %cst_23 = arith.constant 0.353553385 : f32
    %38 = vector.broadcast %cst_23 : f32 to vector<4x8x16xf32>
    %39 = arith.mulf %37, %38 : vector<4x8x16xf32>
    %cst_24 = arith.constant dense<0xFF800000> : vector<4x8xf32>
    %40 = vector.multi_reduction <maximumf>, %39, %cst_24 [2] : vector<4x8x16xf32> to vector<4x8xf32>
    %41 = vector.shape_cast %40 : vector<4x8xf32> to vector<4x8x1xf32>
    %42 = vector.broadcast %41 : vector<4x8x1xf32> to vector<4x8x16xf32>
    %43 = arith.subf %39, %42 : vector<4x8x16xf32>
    %44 = math.exp %43 : vector<4x8x16xf32>
    %cst_25 = arith.constant dense<0.000000e+00> : vector<4x8xf32>
    %45 = vector.multi_reduction <add>, %44, %cst_25 [2] : vector<4x8x16xf32> to vector<4x8xf32>
    %46 = vector.shape_cast %45 : vector<4x8xf32> to vector<4x8x1xf32>
    %47 = tpu.reciprocal %46 {approx = true} : vector<4x8x1xf32> -> vector<4x8x1xf32>
    %48 = vector.broadcast %47 : vector<4x8x1xf32> to vector<4x8x16xf32>
    %49 = arith.mulf %44, %48 : vector<4x8x16xf32>
    "tpu.trace_start"() <{level = 10 : i32, message = "bqk,bkd->bqd"}> : () -> ()
    %cst_26 = arith.constant dense<0.000000e+00> : vector<4x8x8xf32>
    %50 = tpu.matmul %49, %36, %cst_26 {dimension_numbers = #tpu.dot_dimension_numbers<[2], [1], [1], [2], [0, 0, 0, 1, 1, 2], [0], [0]>} : vector<4x8x16xf32>, vector<4x16x8xf32>, vector<4x8x8xf32> -> vector<4x8x8xf32>
    "tpu.trace_stop"() : () -> ()
    %c0_27 = arith.constant 0 : index
    %c0_28 = arith.constant 0 : index
    %c8 = arith.constant 8 : index
    %51 = vector.load %arg9[%c0_27, %c0_28, %c8] : memref<4x8x32xf32, #tpu.memory_space<vmem>>, vector<4x8x8xf32>
    tpu.vector_store %arg9[%c0_27, %c0_28, %c8], %50 {strides = array<i32>} : memref<4x8x32xf32, #tpu.memory_space<vmem>>, vector<4x8x8xf32>,
    %52 = vector.extract_strided_slice %15 {offsets = [0, 0, 16], sizes = [4, 8, 8], strides = [1, 1, 1]} : vector<4x8x32xf32> to vector<4x8x8xf32>
    %53 = vector.extract_strided_slice %10 {offsets = [0, 0, 16], sizes = [4, 16, 8], strides = [1, 1, 1]} : vector<4x16x32xf32> to vector<4x16x8xf32>
    %54 = vector.extract_strided_slice %11 {offsets = [0, 0, 16], sizes = [4, 16, 8], strides = [1, 1, 1]} : vector<4x16x32xf32> to vector<4x16x8xf32>
    "tpu.trace_start"() <{level = 10 : i32, message = "bqd,bkd->bqk"}> : () -> ()
    %cst_29 = arith.constant dense<0.000000e+00> : vector<4x8x16xf32>
    %55 = tpu.matmul %52, %53, %cst_29 {dimension_numbers = #tpu.dot_dimension_numbers<[2], [2], [1], [1], [0, 0, 0, 1, 1, 1], [0], [0]>} : vector<4x8x8xf32>, vector<4x16x8xf32>, vector<4x8x16xf32> -> vector<4x8x16xf32>
    "tpu.trace_stop"() : () -> ()
    %cst_30 = arith.constant 0.353553385 : f32
    %56 = vector.broadcast %cst_30 : f32 to vector<4x8x16xf32>
    %57 = arith.mulf %55, %56 : vector<4x8x16xf32>
    %cst_31 = arith.constant dense<0xFF800000> : vector<4x8xf32>
    %58 = vector.multi_reduction <maximumf>, %57, %cst_31 [2] : vector<4x8x16xf32> to vector<4x8xf32>
    %59 = vector.shape_cast %58 : vector<4x8xf32> to vector<4x8x1xf32>
    %60 = vector.broadcast %59 : vector<4x8x1xf32> to vector<4x8x16xf32>
    %61 = arith.subf %57, %60 : vector<4x8x16xf32>
    %62 = math.exp %61 : vector<4x8x16xf32>
    %cst_32 = arith.constant dense<0.000000e+00> : vector<4x8xf32>
    %63 = vector.multi_reduction <add>, %62, %cst_32 [2] : vector<4x8x16xf32> to vector<4x8xf32>
    %64 = vector.shape_cast %63 : vector<4x8xf32> to vector<4x8x1xf32>
    %65 = tpu.reciprocal %64 {approx = true} : vector<4x8x1xf32> -> vector<4x8x1xf32>
    %66 = vector.broadcast %65 : vector<4x8x1xf32> to vector<4x8x16xf32>
    %67 = arith.mulf %62, %66 : vector<4x8x16xf32>
    "tpu.trace_start"() <{level = 10 : i32, message = "bqk,bkd->bqd"}> : () -> ()
    %cst_33 = arith.constant dense<0.000000e+00> : vector<4x8x8xf32>
    %68 = tpu.matmul %67, %54, %cst_33 {dimension_numbers = #tpu.dot_dimension_numbers<[2], [1], [1], [2], [0, 0, 0, 1, 1, 2], [0], [0]>} : vector<4x8x16xf32>, vector<4x16x8xf32>, vector<4x8x8xf32> -> vector<4x8x8xf32>
    "tpu.trace_stop"() : () -> ()
    %c0_34 = arith.constant 0 : index
    %c0_35 = arith.constant 0 : index
    %c16 = arith.constant 16 : index
    %69 = vector.load %arg9[%c0_34, %c0_35, %c16] : memref<4x8x32xf32, #tpu.memory_space<vmem>>, vector<4x8x8xf32>
    tpu.vector_store %arg9[%c0_34, %c0_35, %c16], %68 {strides = array<i32>} : memref<4x8x32xf32, #tpu.memory_space<vmem>>, vector<4x8x8xf32>,
    %70 = vector.extract_strided_slice %15 {offsets = [0, 0, 24], sizes = [4, 8, 8], strides = [1, 1, 1]} : vector<4x8x32xf32> to vector<4x8x8xf32>
    %71 = vector.extract_strided_slice %10 {offsets = [0, 0, 24], sizes = [4, 16, 8], strides = [1, 1, 1]} : vector<4x16x32xf32> to vector<4x16x8xf32>
    %72 = vector.extract_strided_slice %11 {offsets = [0, 0, 24], sizes = [4, 16, 8], strides = [1, 1, 1]} : vector<4x16x32xf32> to vector<4x16x8xf32>
    "tpu.trace_start"() <{level = 10 : i32, message = "bqd,bkd->bqk"}> : () -> ()
    %cst_36 = arith.constant dense<0.000000e+00> : vector<4x8x16xf32>
    %73 = tpu.matmul %70, %71, %cst_36 {dimension_numbers = #tpu.dot_dimension_numbers<[2], [2], [1], [1], [0, 0, 0, 1, 1, 1], [0], [0]>} : vector<4x8x8xf32>, vector<4x16x8xf32>, vector<4x8x16xf32> -> vector<4x8x16xf32>
    "tpu.trace_stop"() : () -> ()
    %cst_37 = arith.constant 0.353553385 : f32
    %74 = vector.broadcast %cst_37 : f32 to vector<4x8x16xf32>
    %75 = arith.mulf %73, %74 : vector<4x8x16xf32>
    %cst_38 = arith.constant dense<0xFF800000> : vector<4x8xf32>
    %76 = vector.multi_reduction <maximumf>, %75, %cst_38 [2] : vector<4x8x16xf32> to vector<4x8xf32>
    %77 = vector.shape_cast %76 : vector<4x8xf32> to vector<4x8x1xf32>
    %78 = vector.broadcast %77 : vector<4x8x1xf32> to vector<4x8x16xf32>
    %79 = arith.subf %75, %78 : vector<4x8x16xf32>
    %80 = math.exp %79 : vector<4x8x16xf32>
    %cst_39 = arith.constant dense<0.000000e+00> : vector<4x8xf32>
    %81 = vector.multi_reduction <add>, %80, %cst_39 [2] : vector<4x8x16xf32> to vector<4x8xf32>
    %82 = vector.shape_cast %81 : vector<4x8xf32> to vector<4x8x1xf32>
    %83 = tpu.reciprocal %82 {approx = true} : vector<4x8x1xf32> -> vector<4x8x1xf32>
    %84 = vector.broadcast %83 : vector<4x8x1xf32> to vector<4x8x16xf32>
    %85 = arith.mulf %80, %84 : vector<4x8x16xf32>
    "tpu.trace_start"() <{level = 10 : i32, message = "bqk,bkd->bqd"}> : () -> ()
    %cst_40 = arith.constant dense<0.000000e+00> : vector<4x8x8xf32>
    %86 = tpu.matmul %85, %72, %cst_40 {dimension_numbers = #tpu.dot_dimension_numbers<[2], [1], [1], [2], [0, 0, 0, 1, 1, 2], [0], [0]>} : vector<4x8x16xf32>, vector<4x16x8xf32>, vector<4x8x8xf32> -> vector<4x8x8xf32>
    "tpu.trace_stop"() : () -> ()
    %c0_41 = arith.constant 0 : index
    %c0_42 = arith.constant 0 : index
    %c24 = arith.constant 24 : index
    %87 = vector.load %arg9[%c0_41, %c0_42, %c24] : memref<4x8x32xf32, #tpu.memory_space<vmem>>, vector<4x8x8xf32>
    tpu.vector_store %arg9[%c0_41, %c0_42, %c24], %86 {strides = array<i32>} : memref<4x8x32xf32, #tpu.memory_space<vmem>>, vector<4x8x8xf32>,
    %c0_43 = arith.constant 0 : index
    %c0_44 = arith.constant 0 : index
    %c0_45 = arith.constant 0 : index
    %88 = vector.load %arg9[%c0_43, %c0_44, %c0_45] : memref<4x8x32xf32, #tpu.memory_space<vmem>>, vector<4x8x32xf32>
    %89 = vector.shape_cast %88 : vector<4x8x32xf32> to vector<32x32xf32>
    %c0_46 = arith.constant 0 : index
    %c0_47 = arith.constant 0 : index
    %90 = vector.load %arg6[%c0_46, %c0_47] : memref<32x32xf32, #tpu.memory_space<vmem>>, vector<32x32xf32>
    %cst_48 = arith.constant dense<0.000000e+00> : vector<32x32xf32>
    %91 = tpu.matmul %89, %90, %cst_48 {dimension_numbers = #tpu.dot_dimension_numbers<[1], [0], [0], [1], [0, 0, 1, 1], [], []>} : vector<32x32xf32>, vector<32x32xf32>, vector<32x32xf32> -> vector<32x32xf32>
    %c0_49 = arith.constant 0 : index
    %c0_50 = arith.constant 0 : index
    %92 = vector.load %arg7[%c0_49, %c0_50] : memref<1x32xf32, #tpu.memory_space<vmem>>, vector<1x32xf32>
    %93 = vector.broadcast %92 : vector<1x32xf32> to vector<32x32xf32>
    %94 = arith.addf %91, %93 : vector<32x32xf32>
    %95 = vector.shape_cast %94 : vector<32x32xf32> to vector<2x2x8x32xf32>
    %c0_51 = arith.constant 0 : index
    %c0_52 = arith.constant 0 : index
    %c0_53 = arith.constant 0 : index
    %c0_54 = arith.constant 0 : index
    %96 = vector.load %arg8[%c0_51, %c0_52, %c0_53, %c0_54] : memref<2x2x8x32xf32, #tpu.memory_space<vmem>>, vector<2x2x8x32xf32>
    tpu.vector_store %arg8[%c0_51, %c0_52, %c0_53, %c0_54], %95 {strides = array<i32>} : memref<2x2x8x32xf32, #tpu.memory_space<vmem>>, vector<2x2x8x32xf32>,
    return
  }
  func.func @transform_0(%arg0: i32) -> (i32, i32, i32, i32) {
    %c0_i32 = arith.constant 0 : i32
    %c0_i32_0 = arith.constant 0 : i32
    %c0_i32_1 = arith.constant 0 : i32
    %c0_i32_2 = arith.constant 0 : i32
    %c0_i32_3 = arith.constant 0 : i32
    return %c0_i32, %c0_i32_0, %c0_i32_1, %c0_i32_2 : i32, i32, i32, i32
  }
  func.func @transform_1(%arg0: i32) -> (i32, i32, i32) {
    %c0_i32 = arith.constant 0 : i32
    %c0_i32_0 = arith.constant 0 : i32
    %c0_i32_1 = arith.constant 0 : i32
    %c0_i32_2 = arith.constant 0 : i32
    return %c0_i32, %c0_i32_0, %c0_i32_1 : i32, i32, i32
  }
  func.func @transform_2(%arg0: i32) -> (i32, i32) {
    %c0_i32 = arith.constant 0 : i32
    %c0_i32_0 = arith.constant 0 : i32
    %c0_i32_1 = arith.constant 0 : i32
    return %c0_i32, %c0_i32_0 : i32, i32
  }
  func.func @transform_3(%arg0: i32) -> (i32, i32) {
    %c0_i32 = arith.constant 0 : i32
    %c0_i32_0 = arith.constant 0 : i32
    %c0_i32_1 = arith.constant 0 : i32
    return %c0_i32, %c0_i32_0 : i32, i32
  }
  func.func @transform_4(%arg0: i32) -> (i32, i32) {
    %c0_i32 = arith.constant 0 : i32
    %c0_i32_0 = arith.constant 0 : i32
    %c0_i32_1 = arith.constant 0 : i32
    return %c0_i32, %c0_i32_0 : i32, i32
  }
  func.func @transform_5(%arg0: i32) -> (i32, i32) {
    %c0_i32 = arith.constant 0 : i32
    %c0_i32_0 = arith.constant 0 : i32
    %c0_i32_1 = arith.constant 0 : i32
    return %c0_i32, %c0_i32_0 : i32, i32
  }
  func.func @transform_6(%arg0: i32) -> (i32, i32) {
    %c0_i32 = arith.constant 0 : i32
    %c0_i32_0 = arith.constant 0 : i32
    %c0_i32_1 = arith.constant 0 : i32
    return %c0_i32, %c0_i32_0 : i32, i32
  }
  func.func @transform_7(%arg0: i32) -> (i32, i32, i32, i32) {
    %c0_i32 = arith.constant 0 : i32
    %c0_i32_0 = arith.constant 0 : i32
    %c0_i32_1 = arith.constant 0 : i32
    %c0_i32_2 = arith.constant 0 : i32
    %c0_i32_3 = arith.constant 0 : i32
    return %c0_i32, %c0_i32_0, %c0_i32_1, %c0_i32_2 : i32, i32, i32, i32
  }
}

</mosaic_0001>

<llo_original>
// kernel: tpu_custom_call.1
$region0: #{tpu_custom_call.1}
  #allocation0 [shape = 'u32[]', space=smem, size = 0x4, offset = 0x4, fixed_abs, tag = 'smem constant byte address 0x4 - core index']
  #allocation1 [shape = 'u32[72,128]{1,0:T(1,128)}', space=vmem, size = 0x9000, scoped, tag = 'internal scratch']
  #allocation2 [shape = 'f32[4,8,32]{2,1,0:T(8,128)}', space=vmem, size = 0x4000, scoped, tag = 'scratch operand']
  %s0 = inlined_call_operand.vmem [shape: f32[2,2,16,8], index: 0, kind: input, shape index: {}]
  %s1 = inlined_call_operand.vmem [shape: f32[2,8,32], index: 1, kind: input, shape index: {}]
  %s2 = inlined_call_operand.vmem [shape: f32[32,32], index: 2, kind: input, shape index: {}]
  %s3 = inlined_call_operand.vmem [shape: f32[8,32], index: 3, kind: input, shape index: {}]
  %s4 = inlined_call_operand.vmem [shape: f32[8,32], index: 4, kind: input, shape index: {}]
  %s5 = inlined_call_operand.vmem [shape: f32[32,32], index: 5, kind: input, shape index: {}]
  %s6 = inlined_call_operand.vmem [shape: f32[1,32], index: 6, kind: input, shape index: {}]
  %s7 = inlined_call_operand.hbm [shape: f32[2,2,8,32], index: 7, kind: output, shape index: {}]
  %s8 = sld [smem:[#allocation0]]
  $region38: #{tpu_custom_call.1} parent=0
    _
  %s10 = ssub.s32 1, %s8
  %s11 = scalar_select 0, %s10, %s8
  $region1: #{tpu_custom_call.1} parent=0
    #allocation3 [shape = 'u8[16384]{0}', space=vmem, size = 0x4000, scoped, tag = 'output window, operand 0, single buffered']
    #allocation4 [shape = 's32[1]{0}', space=sflag, size = 0x4, scoped, tag = 'scoped memory for tpu_custom_call.1']
    %12 = vsyncpa [#allocation4], 0
    // Predicated region
    $region2: #{tpu_custom_call.1} parent=1 // pred_check
      _
    $region3: #{tpu_custom_call.1} parent=1 // pred_check_branch
      %14 = sbr.rel (0) target = $region5
    $region4: #{tpu_custom_call.1} parent=1 // pred_region
      _
    $region5: #{tpu_custom_call.1} parent=1 // pred_fallthru
      _
    // Predicated region
    $region6: #{tpu_custom_call.1} parent=1 // pred_check
      _
    $region7: #{tpu_custom_call.1} parent=1 // pred_check_branch
      %16 = sbr.rel (0) target = $region9
    $region8: #{tpu_custom_call.1} parent=1 // pred_region
      _
    $region9: #{tpu_custom_call.1} parent=1 // pred_fallthru
      _
    // Predicated region
    $region10: #{tpu_custom_call.1} parent=1 // pred_check
      _
    $region11: #{tpu_custom_call.1} parent=1 // pred_check_branch
      %18 = sbr.rel (0) target = $region13
    $region12: #{tpu_custom_call.1} parent=1 // pred_region
      _
    $region13: #{tpu_custom_call.1} parent=1 // pred_fallthru
      _
    // Predicated region
    $region14: #{tpu_custom_call.1} parent=1 // pred_check
      _
    $region15: #{tpu_custom_call.1} parent=1 // pred_check_branch
      %20 = sbr.rel (0) target = $region17
    $region16: #{tpu_custom_call.1} parent=1 // pred_region
      _
    $region17: #{tpu_custom_call.1} parent=1 // pred_fallthru
      _
    // Predicated region
    $region18: #{tpu_custom_call.1} parent=1 // pred_check
      _
    $region19: #{tpu_custom_call.1} parent=1 // pred_check_branch
      %22 = sbr.rel (0) target = $region21
    $region20: #{tpu_custom_call.1} parent=1 // pred_region
      _
    $region21: #{tpu_custom_call.1} parent=1 // pred_fallthru
      _
    // Predicated region
    $region22: #{tpu_custom_call.1} parent=1 // pred_check
      _
    $region23: #{tpu_custom_call.1} parent=1 // pred_check_branch
      %24 = sbr.rel (0) target = $region25
    $region24: #{tpu_custom_call.1} parent=1 // pred_region
      _
    $region25: #{tpu_custom_call.1} parent=1 // pred_fallthru
      _
    // Predicated region
    $region26: #{tpu_custom_call.1} parent=1 // pred_check
      _
    $region27: #{tpu_custom_call.1} parent=1 // pred_check_branch
      %26 = sbr.rel (0) target = $region29
    $region28: #{tpu_custom_call.1} parent=1 // pred_region
      _
    $region29: #{tpu_custom_call.1} parent=1 // pred_fallthru
      _
    %v27 = vld [vmem:[%s0] sm:$0xff]
    %v28 = vld [vmem:[%s0 + $0x8] sm:$0xff]
    %v29 = vld [vmem:[%s0 + $0x10] sm:$0xff]
    %v30 = vld [vmem:[%s0 + $0x18] sm:$0xff]
    %v31 = vld [vmem:[%s0 + $0x20] sm:$0xff]
    %v32 = vld [vmem:[%s0 + $0x28] sm:$0xff]
    %v33 = vld [vmem:[%s0 + $0x30] sm:$0xff]
    %v34 = vld [vmem:[%s0 + $0x38] sm:$0xff]
    %v35 = vld [vmem:[%s1] sm:$0xff]
    %v36 = vld [vmem:[%s1 + $0x8] sm:$0xff]
    %v37 = vld [vmem:[%s3] sm:$0xff]
    %vm38 = vcmask 64512
    %v40 = vsel %vm38, %v27, 0
    %v43 = vsel %vm38, %v28, 0
    %v46 = vsel %vm38, %v29, 0
    %v49 = vsel %vm38, %v30, 0
    %v52 = vsel %vm38, %v31, 0
    %v55 = vsel %vm38, %v32, 0
    %v58 = vsel %vm38, %v33, 0
    %v61 = vsel %vm38, %v34, 0
    %63 = vmatpush.msra.mxu0 0.0
    %64 = vmatpush.msra.mxu0 0.0
    %65 = vmatpush.msra.mxu0 0.0
    %66 = vmatpush.msra.mxu0 0.0
    %67 = vmatpush.msra.mxu0 0.0
    %68 = vmatpush.msra.mxu0 0.0
    %69 = vmatpush.msra.mxu0 0.0
    %70 = vmatpush.msra.mxu0 0.0
    %71 = vmatpush.msra.mxu0 0.0
    %72 = vmatpush.msra.mxu0 0.0
    %73 = vmatpush.msra.mxu0 0.0
    %74 = vmatpush.msra.mxu0 0.0
    %75 = vmatpush.msra.mxu0 0.0
    %76 = vmatpush.msra.mxu0 0.0
    %77 = vmatpush.msra.mxu0 0.0
    %78 = vmatpush.msra.mxu0 %v37
    %79 = vmatmul.f32.gmra.mxu0 %v40
    %v80 = vpop.f32.mrf.mxu0
    %v81 = vadd.f32 0.0, %v80
    %82 = vmatmul.f32.gmra.mxu0 %v43
    %v83 = vpop.f32.mrf.mxu0
    %v84 = vadd.f32 0.0, %v83
    %85 = vmatmul.f32.gmra.mxu0 %v46
    %v86 = vpop.f32.mrf.mxu0
    %v87 = vadd.f32 0.0, %v86
    %88 = vmatmul.f32.gmra.mxu0 %v49
    %v89 = vpop.f32.mrf.mxu0
    %v90 = vadd.f32 0.0, %v89
    %91 = vmatmul.f32.gmra.mxu0 %v52
    %v92 = vpop.f32.mrf.mxu0
    %v93 = vadd.f32 0.0, %v92
    %94 = vmatmul.f32.gmra.mxu0 %v55
    %v95 = vpop.f32.mrf.mxu0
    %v96 = vadd.f32 0.0, %v95
    %97 = vmatmul.f32.gmra.mxu0 %v58
    %v98 = vpop.f32.mrf.mxu0
    %v99 = vadd.f32 0.0, %v98
    %100 = vmatmul.f32.gmra.mxu0 %v61
    %v101 = vpop.f32.mrf.mxu0
    %v102 = vadd.f32 0.0, %v101
    %103 = vdwg.mxu0
    %v104 = vld [vmem:[%s4] sm:$0xff]
    %105 = vmatpush.msra.mxu0 0.0
    %106 = vmatpush.msra.mxu0 0.0
    %107 = vmatpush.msra.mxu0 0.0
    %108 = vmatpush.msra.mxu0 0.0
    %109 = vmatpush.msra.mxu0 0.0
    %110 = vmatpush.msra.mxu0 0.0
    %111 = vmatpush.msra.mxu0 0.0
    %112 = vmatpush.msra.mxu0 0.0
    %113 = vmatpush.msra.mxu0 0.0
    %114 = vmatpush.msra.mxu0 0.0
    %115 = vmatpush.msra.mxu0 0.0
    %116 = vmatpush.msra.mxu0 0.0
    %117 = vmatpush.msra.mxu0 0.0
    %118 = vmatpush.msra.mxu0 0.0
    %119 = vmatpush.msra.mxu0 0.0
    %120 = vmatpush.msra.mxu0 %v104
    %121 = vmatmul.f32.gmra.mxu0 %v40
    %v122 = vpop.f32.mrf.mxu0
    %v123 = vadd.f32 0.0, %v122
    %124 = vmatmul.f32.gmra.mxu0 %v43
    %v125 = vpop.f32.mrf.mxu0
    %v126 = vadd.f32 0.0, %v125
    %127 = vmatmul.f32.gmra.mxu0 %v46
    %v128 = vpop.f32.mrf.mxu0
    %v129 = vadd.f32 0.0, %v128
    %130 = vmatmul.f32.gmra.mxu0 %v49
    %v131 = vpop.f32.mrf.mxu0
    %v132 = vadd.f32 0.0, %v131
    %133 = vmatmul.f32.gmra.mxu0 %v52
    %v134 = vpop.f32.mrf.mxu0
    %v135 = vadd.f32 0.0, %v134
    %136 = vmatmul.f32.gmra.mxu0 %v55
    %v137 = vpop.f32.mrf.mxu0
    %v138 = vadd.f32 0.0, %v137
    %139 = vmatmul.f32.gmra.mxu0 %v58
    %v140 = vpop.f32.mrf.mxu0
    %v141 = vadd.f32 0.0, %v140
    %142 = vmatmul.f32.gmra.mxu0 %v61
    %v143 = vpop.f32.mrf.mxu0
    %v144 = vadd.f32 0.0, %v143
    %145 = vdwg.mxu0
    %v146 = vld [vmem:[%s2] sm:$0xff]
    %v147 = vld [vmem:[%s2 + $0x8] sm:$0xff]
    %v148 = vld [vmem:[%s2 + $0x10] sm:$0xff]
    %v149 = vld [vmem:[%s2 + $0x18] sm:$0xff]
    %vm150 = vcmask 261120
    %v152 = vsel %vm150, %v35, 0
    %v155 = vsel %vm150, %v36, 0
    %157 = vmatpush.msra.mxu0 0.0
    %158 = vmatpush.msra.mxu0 0.0
    %159 = vmatpush.msra.mxu0 0.0
    %160 = vmatpush.msra.mxu0 0.0
    %161 = vmatpush.msra.mxu0 0.0
    %162 = vmatpush.msra.mxu0 0.0
    %163 = vmatpush.msra.mxu0 0.0
    %164 = vmatpush.msra.mxu0 0.0
    %165 = vmatpush.msra.mxu0 0.0
    %166 = vmatpush.msra.mxu0 0.0
    %167 = vmatpush.msra.mxu0 0.0
    %168 = vmatpush.msra.mxu0 0.0
    %169 = vmatpush.msra.mxu0 %v149
    %170 = vmatpush.msra.mxu0 %v148
    %171 = vmatpush.msra.mxu0 %v147
    %172 = vmatpush.msra.mxu0 %v146
    %173 = vmatmul.f32.gmra.mxu0 %v152
    %v174 = vpop.f32.mrf.mxu0
    %v175 = vadd.f32 0.0, %v174
    %176 = vmatmul.f32.gmra.mxu0 %v155
    %v177 = vpop.f32.mrf.mxu0
    %v178 = vadd.f32 0.0, %v177
    %179 = vdwg.mxu0
    %v181 = vsel %vm38, %v175, 0
    %v184 = vsel %vm38, %v81, 0
    %v187 = vsel %vm38, %v84, 0
    %189 = vmatpush.xpose.msra.mxu0 0.0
    %190 = vmatpush.xpose.msra.mxu0 0.0
    %191 = vmatpush.xpose.msra.mxu0 0.0
    %192 = vmatpush.xpose.msra.mxu0 0.0
    %193 = vmatpush.xpose.msra.mxu0 0.0
    %194 = vmatpush.xpose.msra.mxu0 0.0
    %195 = vmatpush.xpose.msra.mxu0 0.0
    %196 = vmatpush.xpose.msra.mxu0 0.0
    %197 = vmatpush.xpose.msra.mxu0 0.0
    %198 = vmatpush.xpose.msra.mxu0 0.0
    %199 = vmatpush.xpose.msra.mxu0 0.0
    %200 = vmatpush.xpose.msra.mxu0 0.0
    %201 = vmatpush.xpose.msra.mxu0 0.0
    %202 = vmatpush.xpose.msra.mxu0 0.0
    %203 = vmatpush.xpose.msra.mxu0 %v187
    %204 = vmatpush.xpose.msra.mxu0 %v184
    %205 = vmatmul.f32.gmra.mxu0 %v181
    %v206 = vpop.f32.mrf.mxu0
    %v207 = vadd.f32 0.0, %v206
    %208 = vdwg.mxu0
    %v210 = vsel %vm38, %v178, 0
    %v213 = vsel %vm38, %v87, 0
    %v216 = vsel %vm38, %v90, 0
    %218 = vmatpush.xpose.msra.mxu0 0.0
    %219 = vmatpush.xpose.msra.mxu0 0.0
    %220 = vmatpush.xpose.msra.mxu0 0.0
    %221 = vmatpush.xpose.msra.mxu0 0.0
    %222 = vmatpush.xpose.msra.mxu0 0.0
    %223 = vmatpush.xpose.msra.mxu0 0.0
    %224 = vmatpush.xpose.msra.mxu0 0.0
    %225 = vmatpush.xpose.msra.mxu0 0.0
    %226 = vmatpush.xpose.msra.mxu0 0.0
    %227 = vmatpush.xpose.msra.mxu0 0.0
    %228 = vmatpush.xpose.msra.mxu0 0.0
    %229 = vmatpush.xpose.msra.mxu0 0.0
    %230 = vmatpush.xpose.msra.mxu0 0.0
    %231 = vmatpush.xpose.msra.mxu0 0.0
    %232 = vmatpush.xpose.msra.mxu0 %v216
    %233 = vmatpush.xpose.msra.mxu0 %v213
    %234 = vmatmul.f32.gmra.mxu0 %v210
    %v235 = vpop.f32.mrf.mxu0
    %v236 = vadd.f32 0.0, %v235
    %237 = vdwg.mxu0
    %v239 = vsel %vm38, %v93, 0
    %v242 = vsel %vm38, %v96, 0
    %244 = vmatpush.xpose.msra.mxu0 0.0
    %245 = vmatpush.xpose.msra.mxu0 0.0
    %246 = vmatpush.xpose.msra.mxu0 0.0
    %247 = vmatpush.xpose.msra.mxu0 0.0
    %248 = vmatpush.xpose.msra.mxu0 0.0
    %249 = vmatpush.xpose.msra.mxu0 0.0
    %250 = vmatpush.xpose.msra.mxu0 0.0
    %251 = vmatpush.xpose.msra.mxu0 0.0
    %252 = vmatpush.xpose.msra.mxu0 0.0
    %253 = vmatpush.xpose.msra.mxu0 0.0
    %254 = vmatpush.xpose.msra.mxu0 0.0
    %255 = vmatpush.xpose.msra.mxu0 0.0
    %256 = vmatpush.xpose.msra.mxu0 0.0
    %257 = vmatpush.xpose.msra.mxu0 0.0
    %258 = vmatpush.xpose.msra.mxu0 %v242
    %259 = vmatpush.xpose.msra.mxu0 %v239
    %260 = vmatmul.f32.gmra.mxu0 %v181
    %v261 = vpop.f32.mrf.mxu0
    %v262 = vadd.f32 0.0, %v261
    %263 = vdwg.mxu0
    %v265 = vsel %vm38, %v99, 0
    %v268 = vsel %vm38, %v102, 0
    %270 = vmatpush.xpose.msra.mxu0 0.0
    %271 = vmatpush.xpose.msra.mxu0 0.0
    %272 = vmatpush.xpose.msra.mxu0 0.0
    %273 = vmatpush.xpose.msra.mxu0 0.0
    %274 = vmatpush.xpose.msra.mxu0 0.0
    %275 = vmatpush.xpose.msra.mxu0 0.0
    %276 = vmatpush.xpose.msra.mxu0 0.0
    %277 = vmatpush.xpose.msra.mxu0 0.0
    %278 = vmatpush.xpose.msra.mxu0 0.0
    %279 = vmatpush.xpose.msra.mxu0 0.0
    %280 = vmatpush.xpose.msra.mxu0 0.0
    %281 = vmatpush.xpose.msra.mxu0 0.0
    %282 = vmatpush.xpose.msra.mxu0 0.0
    %283 = vmatpush.xpose.msra.mxu0 0.0
    %284 = vmatpush.xpose.msra.mxu0 %v268
    %285 = vmatpush.xpose.msra.mxu0 %v265
    %286 = vmatmul.f32.gmra.mxu0 %v210
    %v287 = vpop.f32.mrf.mxu0
    %v288 = vadd.f32 0.0, %v287
    %289 = vdwg.mxu0
    %v290 = vmul.f32 %v207, 0.35355338
    %v291 = vmul.f32 %v236, 0.35355338
    %v292 = vmul.f32 %v262, 0.35355338
    %v293 = vmul.f32 %v288, 0.35355338
    %vm294 = vcmask 130048
    %v295 = vsel %vm294, %v290, -inf
    %296 = vmax.xlane.f32.xlu0 %v295
    %v297 = vpop.xlane.xlu0 %296
    %v298 = vsel %vm294, %v291, -inf
    %299 = vmax.xlane.f32.xlu0 %v298
    %v300 = vpop.xlane.xlu0 %299
    %v301 = vsel %vm294, %v292, -inf
    %302 = vmax.xlane.f32.xlu0 %v301
    %v303 = vpop.xlane.xlu0 %302
    %v304 = vsel %vm294, %v293, -inf
    %305 = vmax.xlane.f32.xlu0 %v304
    %v306 = vpop.xlane.xlu0 %305
    %v307 = vsub.f32 %v290, %v297
    %v308 = vsub.f32 %v291, %v300
    %v309 = vsub.f32 %v292, %v303
    %v310 = vsub.f32 %v293, %v306
    %v311 = vmul.f32 %v307, 1.442695
    %v312 = vpow.pop %v311
    %v313 = vmul.f32 %v308, 1.442695
    %v314 = vpow.pop %v313
    %v315 = vmul.f32 %v309, 1.442695
    %v316 = vpow.pop %v315
    %v317 = vmul.f32 %v310, 1.442695
    %v318 = vpow.pop %v317
    %v319 = vsel %vm294, %v312, 0.0
    %320 = vadd.xlane.f32.xlu0 %v319
    %v321 = vpop.xlane.xlu0 %320
    %v322 = vsel %vm294, %v314, 0.0
    %323 = vadd.xlane.f32.xlu0 %v322
    %v324 = vpop.xlane.xlu0 %323
    %v325 = vsel %vm294, %v316, 0.0
    %326 = vadd.xlane.f32.xlu0 %v325
    %v327 = vpop.xlane.xlu0 %326
    %v328 = vsel %vm294, %v318, 0.0
    %329 = vadd.xlane.f32.xlu0 %v328
    %v330 = vpop.xlane.xlu0 %329
    %v331 = vrcp.pop %v321
    %v332 = vrcp.pop %v324
    %v333 = vrcp.pop %v327
    %v334 = vrcp.pop %v330
    %v335 = vmul.f32 %v312, %v331
    %v336 = vmul.f32 %v314, %v332
    %v337 = vmul.f32 %v316, %v333
    %v338 = vmul.f32 %v318, %v334
    %v340 = vsel %vm294, %v335, 0
    %342 = vmatpush.msra.mxu0 0.0
    %343 = vmatpush.msra.mxu0 0.0
    %344 = vmatpush.msra.mxu0 0.0
    %345 = vmatpush.msra.mxu0 0.0
    %346 = vmatpush.msra.mxu0 0.0
    %347 = vmatpush.msra.mxu0 0.0
    %348 = vmatpush.msra.mxu0 0.0
    %349 = vmatpush.msra.mxu0 0.0
    %350 = vmatpush.msra.mxu0 0.0
    %351 = vmatpush.msra.mxu0 0.0
    %352 = vmatpush.msra.mxu0 0.0
    %353 = vmatpush.msra.mxu0 0.0
    %354 = vmatpush.msra.mxu0 0.0
    %355 = vmatpush.msra.mxu0 0.0
    %356 = vmatpush.msra.mxu0 %v126
    %357 = vmatpush.msra.mxu0 %v123
    %358 = vmatmul.f32.gmra.mxu0 %v340
    %v359 = vpop.f32.mrf.mxu0
    %v360 = vadd.f32 0.0, %v359
    %361 = vdwg.mxu0
    %v363 = vsel %vm294, %v336, 0
    %365 = vmatpush.msra.mxu0 0.0
    %366 = vmatpush.msra.mxu0 0.0
    %367 = vmatpush.msra.mxu0 0.0
    %368 = vmatpush.msra.mxu0 0.0
    %369 = vmatpush.msra.mxu0 0.0
    %370 = vmatpush.msra.mxu0 0.0
    %371 = vmatpush.msra.mxu0 0.0
    %372 = vmatpush.msra.mxu0 0.0
    %373 = vmatpush.msra.mxu0 0.0
    %374 = vmatpush.msra.mxu0 0.0
    %375 = vmatpush.msra.mxu0 0.0
    %376 = vmatpush.msra.mxu0 0.0
    %377 = vmatpush.msra.mxu0 0.0
    %378 = vmatpush.msra.mxu0 0.0
    %379 = vmatpush.msra.mxu0 %v132
    %380 = vmatpush.msra.mxu0 %v129
    %381 = vmatmul.f32.gmra.mxu0 %v363
    %v382 = vpop.f32.mrf.mxu0
    %v383 = vadd.f32 0.0, %v382
    %384 = vdwg.mxu0
    %v386 = vsel %vm294, %v337, 0
    %388 = vmatpush.msra.mxu0 0.0
    %389 = vmatpush.msra.mxu0 0.0
    %390 = vmatpush.msra.mxu0 0.0
    %391 = vmatpush.msra.mxu0 0.0
    %392 = vmatpush.msra.mxu0 0.0
    %393 = vmatpush.msra.mxu0 0.0
    %394 = vmatpush.msra.mxu0 0.0
    %395 = vmatpush.msra.mxu0 0.0
    %396 = vmatpush.msra.mxu0 0.0
    %397 = vmatpush.msra.mxu0 0.0
    %398 = vmatpush.msra.mxu0 0.0
    %399 = vmatpush.msra.mxu0 0.0
    %400 = vmatpush.msra.mxu0 0.0
    %401 = vmatpush.msra.mxu0 0.0
    %402 = vmatpush.msra.mxu0 %v138
    %403 = vmatpush.msra.mxu0 %v135
    %404 = vmatmul.f32.gmra.mxu0 %v386
    %v405 = vpop.f32.mrf.mxu0
    %v406 = vadd.f32 0.0, %v405
    %407 = vdwg.mxu0
    %v409 = vsel %vm294, %v338, 0
    %411 = vmatpush.msra.mxu0 0.0
    %412 = vmatpush.msra.mxu0 0.0
    %413 = vmatpush.msra.mxu0 0.0
    %414 = vmatpush.msra.mxu0 0.0
    %415 = vmatpush.msra.mxu0 0.0
    %416 = vmatpush.msra.mxu0 0.0
    %417 = vmatpush.msra.mxu0 0.0
    %418 = vmatpush.msra.mxu0 0.0
    %419 = vmatpush.msra.mxu0 0.0
    %420 = vmatpush.msra.mxu0 0.0
    %421 = vmatpush.msra.mxu0 0.0
    %422 = vmatpush.msra.mxu0 0.0
    %423 = vmatpush.msra.mxu0 0.0
    %424 = vmatpush.msra.mxu0 0.0
    %425 = vmatpush.msra.mxu0 %v144
    %426 = vmatpush.msra.mxu0 %v141
    %427 = vmatmul.f32.gmra.mxu0 %v409
    %v428 = vpop.f32.mrf.mxu0
    %v429 = vadd.f32 0.0, %v428
    %430 = vdwg.mxu0
    %431 = vst.msk [vmem:[#allocation2] sm:$0xff] %vm38, %v360
    %432 = vst.msk [vmem:[#allocation2 + $0x8] sm:$0xff] %vm38, %v383
    %433 = vst.msk [vmem:[#allocation2 + $0x10] sm:$0xff] %vm38, %v406
    %434 = vst.msk [vmem:[#allocation2 + $0x18] sm:$0xff] %vm38, %v429
    %435 = vrot.lane.b32.xlu0 %v175, 120
    %v436 = vpop.permute.xlu0 %435
    %437 = vrot.lane.b32.xlu0 %v81, 120
    %v438 = vpop.permute.xlu0 %437
    %439 = vrot.lane.b32.xlu0 %v84, 120
    %v440 = vpop.permute.xlu0 %439
    %v441 = vsel %vm38, %v436, 0
    %v443 = vsel %vm38, %v438, 0
    %v445 = vsel %vm38, %v440, 0
    %447 = vmatpush.xpose.msra.mxu0 0.0
    %448 = vmatpush.xpose.msra.mxu0 0.0
    %449 = vmatpush.xpose.msra.mxu0 0.0
    %450 = vmatpush.xpose.msra.mxu0 0.0
    %451 = vmatpush.xpose.msra.mxu0 0.0
    %452 = vmatpush.xpose.msra.mxu0 0.0
    %453 = vmatpush.xpose.msra.mxu0 0.0
    %454 = vmatpush.xpose.msra.mxu0 0.0
    %455 = vmatpush.xpose.msra.mxu0 0.0
    %456 = vmatpush.xpose.msra.mxu0 0.0
    %457 = vmatpush.xpose.msra.mxu0 0.0
    %458 = vmatpush.xpose.msra.mxu0 0.0
    %459 = vmatpush.xpose.msra.mxu0 0.0
    %460 = vmatpush.xpose.msra.mxu0 0.0
    %461 = vmatpush.xpose.msra.mxu0 %v445
    %462 = vmatpush.xpose.msra.mxu0 %v443
    %463 = vmatmul.f32.gmra.mxu0 %v441
    %v464 = vpop.f32.mrf.mxu0
    %v465 = vadd.f32 0.0, %v464
    %466 = vdwg.mxu0
    %467 = vrot.lane.b32.xlu0 %v178, 120
    %v468 = vpop.permute.xlu0 %467
    %469 = vrot.lane.b32.xlu0 %v87, 120
    %v470 = vpop.permute.xlu0 %469
    %471 = vrot.lane.b32.xlu0 %v90, 120
    %v472 = vpop.permute.xlu0 %471
    %v473 = vsel %vm38, %v468, 0
    %v475 = vsel %vm38, %v470, 0
    %v477 = vsel %vm38, %v472, 0
    %479 = vmatpush.xpose.msra.mxu0 0.0
    %480 = vmatpush.xpose.msra.mxu0 0.0
    %481 = vmatpush.xpose.msra.mxu0 0.0
    %482 = vmatpush.xpose.msra.mxu0 0.0
    %483 = vmatpush.xpose.msra.mxu0 0.0
    %484 = vmatpush.xpose.msra.mxu0 0.0
    %485 = vmatpush.xpose.msra.mxu0 0.0
    %486 = vmatpush.xpose.msra.mxu0 0.0
    %487 = vmatpush.xpose.msra.mxu0 0.0
    %488 = vmatpush.xpose.msra.mxu0 0.0
    %489 = vmatpush.xpose.msra.mxu0 0.0
    %490 = vmatpush.xpose.msra.mxu0 0.0
    %491 = vmatpush.xpose.msra.mxu0 0.0
    %492 = vmatpush.xpose.msra.mxu0 0.0
    %493 = vmatpush.xpose.msra.mxu0 %v477
    %494 = vmatpush.xpose.msra.mxu0 %v475
    %495 = vmatmul.f32.gmra.mxu0 %v473
    %v496 = vpop.f32.mrf.mxu0
    %v497 = vadd.f32 0.0, %v496
    %498 = vdwg.mxu0
    %499 = vrot.lane.b32.xlu0 %v93, 120
    %v500 = vpop.permute.xlu0 %499
    %501 = vrot.lane.b32.xlu0 %v96, 120
    %v502 = vpop.permute.xlu0 %501
    %v503 = vsel %vm38, %v500, 0
    %v505 = vsel %vm38, %v502, 0
    %507 = vmatpush.xpose.msra.mxu0 0.0
    %508 = vmatpush.xpose.msra.mxu0 0.0
    %509 = vmatpush.xpose.msra.mxu0 0.0
    %510 = vmatpush.xpose.msra.mxu0 0.0
    %511 = vmatpush.xpose.msra.mxu0 0.0
    %512 = vmatpush.xpose.msra.mxu0 0.0
    %513 = vmatpush.xpose.msra.mxu0 0.0
    %514 = vmatpush.xpose.msra.mxu0 0.0
    %515 = vmatpush.xpose.msra.mxu0 0.0
    %516 = vmatpush.xpose.msra.mxu0 0.0
    %517 = vmatpush.xpose.msra.mxu0 0.0
    %518 = vmatpush.xpose.msra.mxu0 0.0
    %519 = vmatpush.xpose.msra.mxu0 0.0
    %520 = vmatpush.xpose.msra.mxu0 0.0
    %521 = vmatpush.xpose.msra.mxu0 %v505
    %522 = vmatpush.xpose.msra.mxu0 %v503
    %523 = vmatmul.f32.gmra.mxu0 %v441
    %v524 = vpop.f32.mrf.mxu0
    %v525 = vadd.f32 0.0, %v524
    %526 = vdwg.mxu0
    %527 = vrot.lane.b32.xlu0 %v99, 120
    %v528 = vpop.permute.xlu0 %527
    %529 = vrot.lane.b32.xlu0 %v102, 120
    %v530 = vpop.permute.xlu0 %529
    %v531 = vsel %vm38, %v528, 0
    %v533 = vsel %vm38, %v530, 0
    %535 = vmatpush.xpose.msra.mxu0 0.0
    %536 = vmatpush.xpose.msra.mxu0 0.0
    %537 = vmatpush.xpose.msra.mxu0 0.0
    %538 = vmatpush.xpose.msra.mxu0 0.0
    %539 = vmatpush.xpose.msra.mxu0 0.0
    %540 = vmatpush.xpose.msra.mxu0 0.0
    %541 = vmatpush.xpose.msra.mxu0 0.0
    %542 = vmatpush.xpose.msra.mxu0 0.0
    %543 = vmatpush.xpose.msra.mxu0 0.0
    %544 = vmatpush.xpose.msra.mxu0 0.0
    %545 = vmatpush.xpose.msra.mxu0 0.0
    %546 = vmatpush.xpose.msra.mxu0 0.0
    %547 = vmatpush.xpose.msra.mxu0 0.0
    %548 = vmatpush.xpose.msra.mxu0 0.0
    %549 = vmatpush.xpose.msra.mxu0 %v533
    %550 = vmatpush.xpose.msra.mxu0 %v531
    %551 = vmatmul.f32.gmra.mxu0 %v473
    %v552 = vpop.f32.mrf.mxu0
    %v553 = vadd.f32 0.0, %v552
    %554 = vdwg.mxu0
    %v555 = vmul.f32 %v465, 0.35355338
    %v556 = vmul.f32 %v497, 0.35355338
    %v557 = vmul.f32 %v525, 0.35355338
    %v558 = vmul.f32 %v553, 0.35355338
    %v559 = vsel %vm294, %v555, -inf
    %560 = vmax.xlane.f32.xlu0 %v559
    %v561 = vpop.xlane.xlu0 %560
    %v562 = vsel %vm294, %v556, -inf
    %563 = vmax.xlane.f32.xlu0 %v562
    %v564 = vpop.xlane.xlu0 %563
    %v565 = vsel %vm294, %v557, -inf
    %566 = vmax.xlane.f32.xlu0 %v565
    %v567 = vpop.xlane.xlu0 %566
    %v568 = vsel %vm294, %v558, -inf
    %569 = vmax.xlane.f32.xlu0 %v568
    %v570 = vpop.xlane.xlu0 %569
    %v571 = vsub.f32 %v555, %v561
    %v572 = vsub.f32 %v556, %v564
    %v573 = vsub.f32 %v557, %v567
    %v574 = vsub.f32 %v558, %v570
    %v575 = vmul.f32 %v571, 1.442695
    %v576 = vpow.pop %v575
    %v577 = vmul.f32 %v572, 1.442695
    %v578 = vpow.pop %v577
    %v579 = vmul.f32 %v573, 1.442695
    %v580 = vpow.pop %v579
    %v581 = vmul.f32 %v574, 1.442695
    %v582 = vpow.pop %v581
    %v583 = vsel %vm294, %v576, 0.0
    %584 = vadd.xlane.f32.xlu0 %v583
    %v585 = vpop.xlane.xlu0 %584
    %v586 = vsel %vm294, %v578, 0.0
    %587 = vadd.xlane.f32.xlu0 %v586
    %v588 = vpop.xlane.xlu0 %587
    %v589 = vsel %vm294, %v580, 0.0
    %590 = vadd.xlane.f32.xlu0 %v589
    %v591 = vpop.xlane.xlu0 %590
    %v592 = vsel %vm294, %v582, 0.0
    %593 = vadd.xlane.f32.xlu0 %v592
    %v594 = vpop.xlane.xlu0 %593
    %v595 = vrcp.pop %v585
    %v596 = vrcp.pop %v588
    %v597 = vrcp.pop %v591
    %v598 = vrcp.pop %v594
    %v599 = vmul.f32 %v576, %v595
    %v600 = vmul.f32 %v578, %v596
    %v601 = vmul.f32 %v580, %v597
    %v602 = vmul.f32 %v582, %v598
    %605 = vrot.lane.b32.xlu0 %v123, 120
    %v606 = vpop.permute.xlu0 %605
    %607 = vrot.lane.b32.xlu0 %v126, 120
    %v608 = vpop.permute.xlu0 %607
    %v612 = vsel %vm294, %v599, 0
    %614 = vmatpush.msra.mxu0 0.0
    %615 = vmatpush.msra.mxu0 0.0
    %616 = vmatpush.msra.mxu0 0.0
    %617 = vmatpush.msra.mxu0 0.0
    %618 = vmatpush.msra.mxu0 0.0
    %619 = vmatpush.msra.mxu0 0.0
    %620 = vmatpush.msra.mxu0 0.0
    %621 = vmatpush.msra.mxu0 0.0
    %622 = vmatpush.msra.mxu0 0.0
    %623 = vmatpush.msra.mxu0 0.0
    %624 = vmatpush.msra.mxu0 0.0
    %625 = vmatpush.msra.mxu0 0.0
    %626 = vmatpush.msra.mxu0 0.0
    %627 = vmatpush.msra.mxu0 0.0
    %628 = vmatpush.msra.mxu0 %v608
    %629 = vmatpush.msra.mxu0 %v606
    %630 = vmatmul.f32.gmra.mxu0 %v612
    %v631 = vpop.f32.mrf.mxu0
    %v632 = vadd.f32 0.0, %v631
    %633 = vdwg.mxu0
    %636 = vrot.lane.b32.xlu0 %v129, 120
    %v637 = vpop.permute.xlu0 %636
    %638 = vrot.lane.b32.xlu0 %v132, 120
    %v639 = vpop.permute.xlu0 %638
    %v643 = vsel %vm294, %v600, 0
    %645 = vmatpush.msra.mxu0 0.0
    %646 = vmatpush.msra.mxu0 0.0
    %647 = vmatpush.msra.mxu0 0.0
    %648 = vmatpush.msra.mxu0 0.0
    %649 = vmatpush.msra.mxu0 0.0
    %650 = vmatpush.msra.mxu0 0.0
    %651 = vmatpush.msra.mxu0 0.0
    %652 = vmatpush.msra.mxu0 0.0
    %653 = vmatpush.msra.mxu0 0.0
    %654 = vmatpush.msra.mxu0 0.0
    %655 = vmatpush.msra.mxu0 0.0
    %656 = vmatpush.msra.mxu0 0.0
    %657 = vmatpush.msra.mxu0 0.0
    %658 = vmatpush.msra.mxu0 0.0
    %659 = vmatpush.msra.mxu0 %v639
    %660 = vmatpush.msra.mxu0 %v637
    %661 = vmatmul.f32.gmra.mxu0 %v643
    %v662 = vpop.f32.mrf.mxu0
    %v663 = vadd.f32 0.0, %v662
    %664 = vdwg.mxu0
    %667 = vrot.lane.b32.xlu0 %v135, 120
    %v668 = vpop.permute.xlu0 %667
    %669 = vrot.lane.b32.xlu0 %v138, 120
    %v670 = vpop.permute.xlu0 %669
    %v674 = vsel %vm294, %v601, 0
    %676 = vmatpush.msra.mxu0 0.0
    %677 = vmatpush.msra.mxu0 0.0
    %678 = vmatpush.msra.mxu0 0.0
    %679 = vmatpush.msra.mxu0 0.0
    %680 = vmatpush.msra.mxu0 0.0
    %681 = vmatpush.msra.mxu0 0.0
    %682 = vmatpush.msra.mxu0 0.0
    %683 = vmatpush.msra.mxu0 0.0
    %684 = vmatpush.msra.mxu0 0.0
    %685 = vmatpush.msra.mxu0 0.0
    %686 = vmatpush.msra.mxu0 0.0
    %687 = vmatpush.msra.mxu0 0.0
    %688 = vmatpush.msra.mxu0 0.0
    %689 = vmatpush.msra.mxu0 0.0
    %690 = vmatpush.msra.mxu0 %v670
    %691 = vmatpush.msra.mxu0 %v668
    %692 = vmatmul.f32.gmra.mxu0 %v674
    %v693 = vpop.f32.mrf.mxu0
    %v694 = vadd.f32 0.0, %v693
    %695 = vdwg.mxu0
    %698 = vrot.lane.b32.xlu0 %v141, 120
    %v699 = vpop.permute.xlu0 %698
    %700 = vrot.lane.b32.xlu0 %v144, 120
    %v701 = vpop.permute.xlu0 %700
    %v705 = vsel %vm294, %v602, 0
    %707 = vmatpush.msra.mxu0 0.0
    %708 = vmatpush.msra.mxu0 0.0
    %709 = vmatpush.msra.mxu0 0.0
    %710 = vmatpush.msra.mxu0 0.0
    %711 = vmatpush.msra.mxu0 0.0
    %712 = vmatpush.msra.mxu0 0.0
    %713 = vmatpush.msra.mxu0 0.0
    %714 = vmatpush.msra.mxu0 0.0
    %715 = vmatpush.msra.mxu0 0.0
    %716 = vmatpush.msra.mxu0 0.0
    %717 = vmatpush.msra.mxu0 0.0
    %718 = vmatpush.msra.mxu0 0.0
    %719 = vmatpush.msra.mxu0 0.0
    %720 = vmatpush.msra.mxu0 0.0
    %721 = vmatpush.msra.mxu0 %v701
    %722 = vmatpush.msra.mxu0 %v699
    %723 = vmatmul.f32.gmra.mxu0 %v705
    %v724 = vpop.f32.mrf.mxu0
    %v725 = vadd.f32 0.0, %v724
    %726 = vdwg.mxu0
    %731 = vrot.lane.b32.xlu0 %v632, 8
    %v732 = vpop.permute.xlu0 %731
    %733 = vrot.lane.b32.xlu0 %v663, 8
    %v734 = vpop.permute.xlu0 %733
    %735 = vrot.lane.b32.xlu0 %v694, 8
    %v736 = vpop.permute.xlu0 %735
    %737 = vrot.lane.b32.xlu0 %v725, 8
    %v738 = vpop.permute.xlu0 %737
    %vm743 = vcmask 130112
    %744 = vst.msk [vmem:[#allocation2] sm:$0xff] %vm743, %v732
    %745 = vst.msk [vmem:[#allocation2 + $0x8] sm:$0xff] %vm743, %v734
    %746 = vst.msk [vmem:[#allocation2 + $0x10] sm:$0xff] %vm743, %v736
    %747 = vst.msk [vmem:[#allocation2 + $0x18] sm:$0xff] %vm743, %v738
    %748 = vrot.lane.b32.xlu0 %v175, 112
    %v749 = vpop.permute.xlu0 %748
    %750 = vrot.lane.b32.xlu0 %v81, 112
    %v751 = vpop.permute.xlu0 %750
    %752 = vrot.lane.b32.xlu0 %v84, 112
    %v753 = vpop.permute.xlu0 %752
    %v754 = vsel %vm38, %v749, 0
    %v756 = vsel %vm38, %v751, 0
    %v758 = vsel %vm38, %v753, 0
    %760 = vmatpush.xpose.msra.mxu0 0.0
    %761 = vmatpush.xpose.msra.mxu0 0.0
    %762 = vmatpush.xpose.msra.mxu0 0.0
    %763 = vmatpush.xpose.msra.mxu0 0.0
    %764 = vmatpush.xpose.msra.mxu0 0.0
    %765 = vmatpush.xpose.msra.mxu0 0.0
    %766 = vmatpush.xpose.msra.mxu0 0.0
    %767 = vmatpush.xpose.msra.mxu0 0.0
    %768 = vmatpush.xpose.msra.mxu0 0.0
    %769 = vmatpush.xpose.msra.mxu0 0.0
    %770 = vmatpush.xpose.msra.mxu0 0.0
    %771 = vmatpush.xpose.msra.mxu0 0.0
    %772 = vmatpush.xpose.msra.mxu0 0.0
    %773 = vmatpush.xpose.msra.mxu0 0.0
    %774 = vmatpush.xpose.msra.mxu0 %v758
    %775 = vmatpush.xpose.msra.mxu0 %v756
    %776 = vmatmul.f32.gmra.mxu0 %v754
    %v777 = vpop.f32.mrf.mxu0
    %v778 = vadd.f32 0.0, %v777
    %779 = vdwg.mxu0
    %780 = vrot.lane.b32.xlu0 %v178, 112
    %v781 = vpop.permute.xlu0 %780
    %782 = vrot.lane.b32.xlu0 %v87, 112
    %v783 = vpop.permute.xlu0 %782
    %784 = vrot.lane.b32.xlu0 %v90, 112
    %v785 = vpop.permute.xlu0 %784
    %v786 = vsel %vm38, %v781, 0
    %v788 = vsel %vm38, %v783, 0
    %v790 = vsel %vm38, %v785, 0
    %792 = vmatpush.xpose.msra.mxu0 0.0
    %793 = vmatpush.xpose.msra.mxu0 0.0
    %794 = vmatpush.xpose.msra.mxu0 0.0
    %795 = vmatpush.xpose.msra.mxu0 0.0
    %796 = vmatpush.xpose.msra.mxu0 0.0
    %797 = vmatpush.xpose.msra.mxu0 0.0
    %798 = vmatpush.xpose.msra.mxu0 0.0
    %799 = vmatpush.xpose.msra.mxu0 0.0
    %800 = vmatpush.xpose.msra.mxu0 0.0
    %801 = vmatpush.xpose.msra.mxu0 0.0
    %802 = vmatpush.xpose.msra.mxu0 0.0
    %803 = vmatpush.xpose.msra.mxu0 0.0
    %804 = vmatpush.xpose.msra.mxu0 0.0
    %805 = vmatpush.xpose.msra.mxu0 0.0
    %806 = vmatpush.xpose.msra.mxu0 %v790
    %807 = vmatpush.xpose.msra.mxu0 %v788
    %808 = vmatmul.f32.gmra.mxu0 %v786
    %v809 = vpop.f32.mrf.mxu0
    %v810 = vadd.f32 0.0, %v809
    %811 = vdwg.mxu0
    %812 = vrot.lane.b32.xlu0 %v93, 112
    %v813 = vpop.permute.xlu0 %812
    %814 = vrot.lane.b32.xlu0 %v96, 112
    %v815 = vpop.permute.xlu0 %814
    %v816 = vsel %vm38, %v813, 0
    %v818 = vsel %vm38, %v815, 0
    %820 = vmatpush.xpose.msra.mxu0 0.0
    %821 = vmatpush.xpose.msra.mxu0 0.0
    %822 = vmatpush.xpose.msra.mxu0 0.0
    %823 = vmatpush.xpose.msra.mxu0 0.0
    %824 = vmatpush.xpose.msra.mxu0 0.0
    %825 = vmatpush.xpose.msra.mxu0 0.0
    %826 = vmatpush.xpose.msra.mxu0 0.0
    %827 = vmatpush.xpose.msra.mxu0 0.0
    %828 = vmatpush.xpose.msra.mxu0 0.0
    %829 = vmatpush.xpose.msra.mxu0 0.0
    %830 = vmatpush.xpose.msra.mxu0 0.0
    %831 = vmatpush.xpose.msra.mxu0 0.0
    %832 = vmatpush.xpose.msra.mxu0 0.0
    %833 = vmatpush.xpose.msra.mxu0 0.0
    %834 = vmatpush.xpose.msra.mxu0 %v818
    %835 = vmatpush.xpose.msra.mxu0 %v816
    %836 = vmatmul.f32.gmra.mxu0 %v754
    %v837 = vpop.f32.mrf.mxu0
    %v838 = vadd.f32 0.0, %v837
    %839 = vdwg.mxu0
    %840 = vrot.lane.b32.xlu0 %v99, 112
    %v841 = vpop.permute.xlu0 %840
    %842 = vrot.lane.b32.xlu0 %v102, 112
    %v843 = vpop.permute.xlu0 %842
    %v844 = vsel %vm38, %v841, 0
    %v846 = vsel %vm38, %v843, 0
    %848 = vmatpush.xpose.msra.mxu0 0.0
    %849 = vmatpush.xpose.msra.mxu0 0.0
    %850 = vmatpush.xpose.msra.mxu0 0.0
    %851 = vmatpush.xpose.msra.mxu0 0.0
    %852 = vmatpush.xpose.msra.mxu0 0.0
    %853 = vmatpush.xpose.msra.mxu0 0.0
    %854 = vmatpush.xpose.msra.mxu0 0.0
    %855 = vmatpush.xpose.msra.mxu0 0.0
    %856 = vmatpush.xpose.msra.mxu0 0.0
    %857 = vmatpush.xpose.msra.mxu0 0.0
    %858 = vmatpush.xpose.msra.mxu0 0.0
    %859 = vmatpush.xpose.msra.mxu0 0.0
    %860 = vmatpush.xpose.msra.mxu0 0.0
    %861 = vmatpush.xpose.msra.mxu0 0.0
    %862 = vmatpush.xpose.msra.mxu0 %v846
    %863 = vmatpush.xpose.msra.mxu0 %v844
    %864 = vmatmul.f32.gmra.mxu0 %v786
    %v865 = vpop.f32.mrf.mxu0
    %v866 = vadd.f32 0.0, %v865
    %867 = vdwg.mxu0
    %v868 = vmul.f32 %v778, 0.35355338
    %v869 = vmul.f32 %v810, 0.35355338
    %v870 = vmul.f32 %v838, 0.35355338
    %v871 = vmul.f32 %v866, 0.35355338
    %v872 = vsel %vm294, %v868, -inf
    %873 = vmax.xlane.f32.xlu0 %v872
    %v874 = vpop.xlane.xlu0 %873
    %v875 = vsel %vm294, %v869, -inf
    %876 = vmax.xlane.f32.xlu0 %v875
    %v877 = vpop.xlane.xlu0 %876
    %v878 = vsel %vm294, %v870, -inf
    %879 = vmax.xlane.f32.xlu0 %v878
    %v880 = vpop.xlane.xlu0 %879
    %v881 = vsel %vm294, %v871, -inf
    %882 = vmax.xlane.f32.xlu0 %v881
    %v883 = vpop.xlane.xlu0 %882
    %v884 = vsub.f32 %v868, %v874
    %v885 = vsub.f32 %v869, %v877
    %v886 = vsub.f32 %v870, %v880
    %v887 = vsub.f32 %v871, %v883
    %v888 = vmul.f32 %v884, 1.442695
    %v889 = vpow.pop %v888
    %v890 = vmul.f32 %v885, 1.442695
    %v891 = vpow.pop %v890
    %v892 = vmul.f32 %v886, 1.442695
    %v893 = vpow.pop %v892
    %v894 = vmul.f32 %v887, 1.442695
    %v895 = vpow.pop %v894
    %v896 = vsel %vm294, %v889, 0.0
    %897 = vadd.xlane.f32.xlu0 %v896
    %v898 = vpop.xlane.xlu0 %897
    %v899 = vsel %vm294, %v891, 0.0
    %900 = vadd.xlane.f32.xlu0 %v899
    %v901 = vpop.xlane.xlu0 %900
    %v902 = vsel %vm294, %v893, 0.0
    %903 = vadd.xlane.f32.xlu0 %v902
    %v904 = vpop.xlane.xlu0 %903
    %v905 = vsel %vm294, %v895, 0.0
    %906 = vadd.xlane.f32.xlu0 %v905
    %v907 = vpop.xlane.xlu0 %906
    %v908 = vrcp.pop %v898
    %v909 = vrcp.pop %v901
    %v910 = vrcp.pop %v904
    %v911 = vrcp.pop %v907
    %v912 = vmul.f32 %v889, %v908
    %v913 = vmul.f32 %v891, %v909
    %v914 = vmul.f32 %v893, %v910
    %v915 = vmul.f32 %v895, %v911
    %916 = vrot.lane.b32.xlu0 %v123, 112
    %v917 = vpop.permute.xlu0 %916
    %918 = vrot.lane.b32.xlu0 %v126, 112
    %v919 = vpop.permute.xlu0 %918
    %v923 = vsel %vm294, %v912, 0
    %925 = vmatpush.msra.mxu0 0.0
    %926 = vmatpush.msra.mxu0 0.0
    %927 = vmatpush.msra.mxu0 0.0
    %928 = vmatpush.msra.mxu0 0.0
    %929 = vmatpush.msra.mxu0 0.0
    %930 = vmatpush.msra.mxu0 0.0
    %931 = vmatpush.msra.mxu0 0.0
    %932 = vmatpush.msra.mxu0 0.0
    %933 = vmatpush.msra.mxu0 0.0
    %934 = vmatpush.msra.mxu0 0.0
    %935 = vmatpush.msra.mxu0 0.0
    %936 = vmatpush.msra.mxu0 0.0
    %937 = vmatpush.msra.mxu0 0.0
    %938 = vmatpush.msra.mxu0 0.0
    %939 = vmatpush.msra.mxu0 %v919
    %940 = vmatpush.msra.mxu0 %v917
    %941 = vmatmul.f32.gmra.mxu0 %v923
    %v942 = vpop.f32.mrf.mxu0
    %v943 = vadd.f32 0.0, %v942
    %944 = vdwg.mxu0
    %945 = vrot.lane.b32.xlu0 %v129, 112
    %v946 = vpop.permute.xlu0 %945
    %947 = vrot.lane.b32.xlu0 %v132, 112
    %v948 = vpop.permute.xlu0 %947
    %v952 = vsel %vm294, %v913, 0
    %954 = vmatpush.msra.mxu0 0.0
    %955 = vmatpush.msra.mxu0 0.0
    %956 = vmatpush.msra.mxu0 0.0
    %957 = vmatpush.msra.mxu0 0.0
    %958 = vmatpush.msra.mxu0 0.0
    %959 = vmatpush.msra.mxu0 0.0
    %960 = vmatpush.msra.mxu0 0.0
    %961 = vmatpush.msra.mxu0 0.0
    %962 = vmatpush.msra.mxu0 0.0
    %963 = vmatpush.msra.mxu0 0.0
    %964 = vmatpush.msra.mxu0 0.0
    %965 = vmatpush.msra.mxu0 0.0
    %966 = vmatpush.msra.mxu0 0.0
    %967 = vmatpush.msra.mxu0 0.0
    %968 = vmatpush.msra.mxu0 %v948
    %969 = vmatpush.msra.mxu0 %v946
    %970 = vmatmul.f32.gmra.mxu0 %v952
    %v971 = vpop.f32.mrf.mxu0
    %v972 = vadd.f32 0.0, %v971
    %973 = vdwg.mxu0
    %974 = vrot.lane.b32.xlu0 %v135, 112
    %v975 = vpop.permute.xlu0 %974
    %976 = vrot.lane.b32.xlu0 %v138, 112
    %v977 = vpop.permute.xlu0 %976
    %v981 = vsel %vm294, %v914, 0
    %983 = vmatpush.msra.mxu0 0.0
    %984 = vmatpush.msra.mxu0 0.0
    %985 = vmatpush.msra.mxu0 0.0
    %986 = vmatpush.msra.mxu0 0.0
    %987 = vmatpush.msra.mxu0 0.0
    %988 = vmatpush.msra.mxu0 0.0
    %989 = vmatpush.msra.mxu0 0.0
    %990 = vmatpush.msra.mxu0 0.0
    %991 = vmatpush.msra.mxu0 0.0
    %992 = vmatpush.msra.mxu0 0.0
    %993 = vmatpush.msra.mxu0 0.0
    %994 = vmatpush.msra.mxu0 0.0
    %995 = vmatpush.msra.mxu0 0.0
    %996 = vmatpush.msra.mxu0 0.0
    %997 = vmatpush.msra.mxu0 %v977
    %998 = vmatpush.msra.mxu0 %v975
    %999 = vmatmul.f32.gmra.mxu0 %v981
    %v1000 = vpop.f32.mrf.mxu0
    %v1001 = vadd.f32 0.0, %v1000
    %1002 = vdwg.mxu0
    %1003 = vrot.lane.b32.xlu0 %v141, 112
    %v1004 = vpop.permute.xlu0 %1003
    %1005 = vrot.lane.b32.xlu0 %v144, 112
    %v1006 = vpop.permute.xlu0 %1005
    %v1010 = vsel %vm294, %v915, 0
    %1012 = vmatpush.msra.mxu0 0.0
    %1013 = vmatpush.msra.mxu0 0.0
    %1014 = vmatpush.msra.mxu0 0.0
    %1015 = vmatpush.msra.mxu0 0.0
    %1016 = vmatpush.msra.mxu0 0.0
    %1017 = vmatpush.msra.mxu0 0.0
    %1018 = vmatpush.msra.mxu0 0.0
    %1019 = vmatpush.msra.mxu0 0.0
    %1020 = vmatpush.msra.mxu0 0.0
    %1021 = vmatpush.msra.mxu0 0.0
    %1022 = vmatpush.msra.mxu0 0.0
    %1023 = vmatpush.msra.mxu0 0.0
    %1024 = vmatpush.msra.mxu0 0.0
    %1025 = vmatpush.msra.mxu0 0.0
    %1026 = vmatpush.msra.mxu0 %v1006
    %1027 = vmatpush.msra.mxu0 %v1004
    %1028 = vmatmul.f32.gmra.mxu0 %v1010
    %v1029 = vpop.f32.mrf.mxu0
    %v1030 = vadd.f32 0.0, %v1029
    %1031 = vdwg.mxu0
    %1036 = vrot.lane.b32.xlu0 %v943, 16
    %v1037 = vpop.permute.xlu0 %1036
    %1038 = vrot.lane.b32.xlu0 %v972, 16
    %v1039 = vpop.permute.xlu0 %1038
    %1040 = vrot.lane.b32.xlu0 %v1001, 16
    %v1041 = vpop.permute.xlu0 %1040
    %1042 = vrot.lane.b32.xlu0 %v1030, 16
    %v1043 = vpop.permute.xlu0 %1042
    %vm1048 = vcmask 195712
    %1049 = vst.msk [vmem:[#allocation2] sm:$0xff] %vm1048, %v1037
    %1050 = vst.msk [vmem:[#allocation2 + $0x8] sm:$0xff] %vm1048, %v1039
    %1051 = vst.msk [vmem:[#allocation2 + $0x10] sm:$0xff] %vm1048, %v1041
    %1052 = vst.msk [vmem:[#allocation2 + $0x18] sm:$0xff] %vm1048, %v1043
    %1053 = vrot.lane.b32.xlu0 %v175, 104
    %v1054 = vpop.permute.xlu0 %1053
    %1055 = vrot.lane.b32.xlu0 %v81, 104
    %v1056 = vpop.permute.xlu0 %1055
    %1057 = vrot.lane.b32.xlu0 %v84, 104
    %v1058 = vpop.permute.xlu0 %1057
    %v1059 = vsel %vm38, %v1054, 0
    %v1061 = vsel %vm38, %v1056, 0
    %v1063 = vsel %vm38, %v1058, 0
    %1065 = vmatpush.xpose.msra.mxu0 0.0
    %1066 = vmatpush.xpose.msra.mxu0 0.0
    %1067 = vmatpush.xpose.msra.mxu0 0.0
    %1068 = vmatpush.xpose.msra.mxu0 0.0
    %1069 = vmatpush.xpose.msra.mxu0 0.0
    %1070 = vmatpush.xpose.msra.mxu0 0.0
    %1071 = vmatpush.xpose.msra.mxu0 0.0
    %1072 = vmatpush.xpose.msra.mxu0 0.0
    %1073 = vmatpush.xpose.msra.mxu0 0.0
    %1074 = vmatpush.xpose.msra.mxu0 0.0
    %1075 = vmatpush.xpose.msra.mxu0 0.0
    %1076 = vmatpush.xpose.msra.mxu0 0.0
    %1077 = vmatpush.xpose.msra.mxu0 0.0
    %1078 = vmatpush.xpose.msra.mxu0 0.0
    %1079 = vmatpush.xpose.msra.mxu0 %v1063
    %1080 = vmatpush.xpose.msra.mxu0 %v1061
    %1081 = vmatmul.f32.gmra.mxu0 %v1059
    %v1082 = vpop.f32.mrf.mxu0
    %v1083 = vadd.f32 0.0, %v1082
    %1084 = vdwg.mxu0
    %1085 = vrot.lane.b32.xlu0 %v178, 104
    %v1086 = vpop.permute.xlu0 %1085
    %1087 = vrot.lane.b32.xlu0 %v87, 104
    %v1088 = vpop.permute.xlu0 %1087
    %1089 = vrot.lane.b32.xlu0 %v90, 104
    %v1090 = vpop.permute.xlu0 %1089
    %v1091 = vsel %vm38, %v1086, 0
    %v1093 = vsel %vm38, %v1088, 0
    %v1095 = vsel %vm38, %v1090, 0
    %1097 = vmatpush.xpose.msra.mxu0 0.0
    %1098 = vmatpush.xpose.msra.mxu0 0.0
    %1099 = vmatpush.xpose.msra.mxu0 0.0
    %1100 = vmatpush.xpose.msra.mxu0 0.0
    %1101 = vmatpush.xpose.msra.mxu0 0.0
    %1102 = vmatpush.xpose.msra.mxu0 0.0
    %1103 = vmatpush.xpose.msra.mxu0 0.0
    %1104 = vmatpush.xpose.msra.mxu0 0.0
    %1105 = vmatpush.xpose.msra.mxu0 0.0
    %1106 = vmatpush.xpose.msra.mxu0 0.0
    %1107 = vmatpush.xpose.msra.mxu0 0.0
    %1108 = vmatpush.xpose.msra.mxu0 0.0
    %1109 = vmatpush.xpose.msra.mxu0 0.0
    %1110 = vmatpush.xpose.msra.mxu0 0.0
    %1111 = vmatpush.xpose.msra.mxu0 %v1095
    %1112 = vmatpush.xpose.msra.mxu0 %v1093
    %1113 = vmatmul.f32.gmra.mxu0 %v1091
    %v1114 = vpop.f32.mrf.mxu0
    %v1115 = vadd.f32 0.0, %v1114
    %1116 = vdwg.mxu0
    %1117 = vrot.lane.b32.xlu0 %v93, 104
    %v1118 = vpop.permute.xlu0 %1117
    %1119 = vrot.lane.b32.xlu0 %v96, 104
    %v1120 = vpop.permute.xlu0 %1119
    %v1121 = vsel %vm38, %v1118, 0
    %v1123 = vsel %vm38, %v1120, 0
    %1125 = vmatpush.xpose.msra.mxu0 0.0
    %1126 = vmatpush.xpose.msra.mxu0 0.0
    %1127 = vmatpush.xpose.msra.mxu0 0.0
    %1128 = vmatpush.xpose.msra.mxu0 0.0
    %1129 = vmatpush.xpose.msra.mxu0 0.0
    %1130 = vmatpush.xpose.msra.mxu0 0.0
    %1131 = vmatpush.xpose.msra.mxu0 0.0
    %1132 = vmatpush.xpose.msra.mxu0 0.0
    %1133 = vmatpush.xpose.msra.mxu0 0.0
    %1134 = vmatpush.xpose.msra.mxu0 0.0
    %1135 = vmatpush.xpose.msra.mxu0 0.0
    %1136 = vmatpush.xpose.msra.mxu0 0.0
    %1137 = vmatpush.xpose.msra.mxu0 0.0
    %1138 = vmatpush.xpose.msra.mxu0 0.0
    %1139 = vmatpush.xpose.msra.mxu0 %v1123
    %1140 = vmatpush.xpose.msra.mxu0 %v1121
    %1141 = vmatmul.f32.gmra.mxu0 %v1059
    %v1142 = vpop.f32.mrf.mxu0
    %v1143 = vadd.f32 0.0, %v1142
    %1144 = vdwg.mxu0
    %1145 = vrot.lane.b32.xlu0 %v99, 104
    %v1146 = vpop.permute.xlu0 %1145
    %1147 = vrot.lane.b32.xlu0 %v102, 104
    %v1148 = vpop.permute.xlu0 %1147
    %v1149 = vsel %vm38, %v1146, 0
    %v1151 = vsel %vm38, %v1148, 0
    %1153 = vmatpush.xpose.msra.mxu0 0.0
    %1154 = vmatpush.xpose.msra.mxu0 0.0
    %1155 = vmatpush.xpose.msra.mxu0 0.0
    %1156 = vmatpush.xpose.msra.mxu0 0.0
    %1157 = vmatpush.xpose.msra.mxu0 0.0
    %1158 = vmatpush.xpose.msra.mxu0 0.0
    %1159 = vmatpush.xpose.msra.mxu0 0.0
    %1160 = vmatpush.xpose.msra.mxu0 0.0
    %1161 = vmatpush.xpose.msra.mxu0 0.0
    %1162 = vmatpush.xpose.msra.mxu0 0.0
    %1163 = vmatpush.xpose.msra.mxu0 0.0
    %1164 = vmatpush.xpose.msra.mxu0 0.0
    %1165 = vmatpush.xpose.msra.mxu0 0.0
    %1166 = vmatpush.xpose.msra.mxu0 0.0
    %1167 = vmatpush.xpose.msra.mxu0 %v1151
    %1168 = vmatpush.xpose.msra.mxu0 %v1149
    %1169 = vmatmul.f32.gmra.mxu0 %v1091
    %v1170 = vpop.f32.mrf.mxu0
    %v1171 = vadd.f32 0.0, %v1170
    %1172 = vdwg.mxu0
    %v1173 = vmul.f32 %v1083, 0.35355338
    %v1174 = vmul.f32 %v1115, 0.35355338
    %v1175 = vmul.f32 %v1143, 0.35355338
    %v1176 = vmul.f32 %v1171, 0.35355338
    %v1177 = vsel %vm294, %v1173, -inf
    %1178 = vmax.xlane.f32.xlu0 %v1177
    %v1179 = vpop.xlane.xlu0 %1178
    %v1180 = vsel %vm294, %v1174, -inf
    %1181 = vmax.xlane.f32.xlu0 %v1180
    %v1182 = vpop.xlane.xlu0 %1181
    %v1183 = vsel %vm294, %v1175, -inf
    %1184 = vmax.xlane.f32.xlu0 %v1183
    %v1185 = vpop.xlane.xlu0 %1184
    %v1186 = vsel %vm294, %v1176, -inf
    %1187 = vmax.xlane.f32.xlu0 %v1186
    %v1188 = vpop.xlane.xlu0 %1187
    %v1189 = vsub.f32 %v1173, %v1179
    %v1190 = vsub.f32 %v1174, %v1182
    %v1191 = vsub.f32 %v1175, %v1185
    %v1192 = vsub.f32 %v1176, %v1188
    %v1193 = vmul.f32 %v1189, 1.442695
    %v1194 = vpow.pop %v1193
    %v1195 = vmul.f32 %v1190, 1.442695
    %v1196 = vpow.pop %v1195
    %v1197 = vmul.f32 %v1191, 1.442695
    %v1198 = vpow.pop %v1197
    %v1199 = vmul.f32 %v1192, 1.442695
    %v1200 = vpow.pop %v1199
    %v1201 = vsel %vm294, %v1194, 0.0
    %1202 = vadd.xlane.f32.xlu0 %v1201
    %v1203 = vpop.xlane.xlu0 %1202
    %v1204 = vsel %vm294, %v1196, 0.0
    %1205 = vadd.xlane.f32.xlu0 %v1204
    %v1206 = vpop.xlane.xlu0 %1205
    %v1207 = vsel %vm294, %v1198, 0.0
    %1208 = vadd.xlane.f32.xlu0 %v1207
    %v1209 = vpop.xlane.xlu0 %1208
    %v1210 = vsel %vm294, %v1200, 0.0
    %1211 = vadd.xlane.f32.xlu0 %v1210
    %v1212 = vpop.xlane.xlu0 %1211
    %v1213 = vrcp.pop %v1203
    %v1214 = vrcp.pop %v1206
    %v1215 = vrcp.pop %v1209
    %v1216 = vrcp.pop %v1212
    %v1217 = vmul.f32 %v1194, %v1213
    %v1218 = vmul.f32 %v1196, %v1214
    %v1219 = vmul.f32 %v1198, %v1215
    %v1220 = vmul.f32 %v1200, %v1216
    %1221 = vrot.lane.b32.xlu0 %v123, 104
    %v1222 = vpop.permute.xlu0 %1221
    %1223 = vrot.lane.b32.xlu0 %v126, 104
    %v1224 = vpop.permute.xlu0 %1223
    %v1228 = vsel %vm294, %v1217, 0
    %1230 = vmatpush.msra.mxu0 0.0
    %1231 = vmatpush.msra.mxu0 0.0
    %1232 = vmatpush.msra.mxu0 0.0
    %1233 = vmatpush.msra.mxu0 0.0
    %1234 = vmatpush.msra.mxu0 0.0
    %1235 = vmatpush.msra.mxu0 0.0
    %1236 = vmatpush.msra.mxu0 0.0
    %1237 = vmatpush.msra.mxu0 0.0
    %1238 = vmatpush.msra.mxu0 0.0
    %1239 = vmatpush.msra.mxu0 0.0
    %1240 = vmatpush.msra.mxu0 0.0
    %1241 = vmatpush.msra.mxu0 0.0
    %1242 = vmatpush.msra.mxu0 0.0
    %1243 = vmatpush.msra.mxu0 0.0
    %1244 = vmatpush.msra.mxu0 %v1224
    %1245 = vmatpush.msra.mxu0 %v1222
    %1246 = vmatmul.f32.gmra.mxu0 %v1228
    %v1247 = vpop.f32.mrf.mxu0
    %v1248 = vadd.f32 0.0, %v1247
    %1249 = vdwg.mxu0
    %1250 = vrot.lane.b32.xlu0 %v129, 104
    %v1251 = vpop.permute.xlu0 %1250
    %1252 = vrot.lane.b32.xlu0 %v132, 104
    %v1253 = vpop.permute.xlu0 %1252
    %v1257 = vsel %vm294, %v1218, 0
    %1259 = vmatpush.msra.mxu0 0.0
    %1260 = vmatpush.msra.mxu0 0.0
    %1261 = vmatpush.msra.mxu0 0.0
    %1262 = vmatpush.msra.mxu0 0.0
    %1263 = vmatpush.msra.mxu0 0.0
    %1264 = vmatpush.msra.mxu0 0.0
    %1265 = vmatpush.msra.mxu0 0.0
    %1266 = vmatpush.msra.mxu0 0.0
    %1267 = vmatpush.msra.mxu0 0.0
    %1268 = vmatpush.msra.mxu0 0.0
    %1269 = vmatpush.msra.mxu0 0.0
    %1270 = vmatpush.msra.mxu0 0.0
    %1271 = vmatpush.msra.mxu0 0.0
    %1272 = vmatpush.msra.mxu0 0.0
    %1273 = vmatpush.msra.mxu0 %v1253
    %1274 = vmatpush.msra.mxu0 %v1251
    %1275 = vmatmul.f32.gmra.mxu0 %v1257
    %v1276 = vpop.f32.mrf.mxu0
    %v1277 = vadd.f32 0.0, %v1276
    %1278 = vdwg.mxu0
    %1279 = vrot.lane.b32.xlu0 %v135, 104
    %v1280 = vpop.permute.xlu0 %1279
    %1281 = vrot.lane.b32.xlu0 %v138, 104
    %v1282 = vpop.permute.xlu0 %1281
    %v1286 = vsel %vm294, %v1219, 0
    %1288 = vmatpush.msra.mxu0 0.0
    %1289 = vmatpush.msra.mxu0 0.0
    %1290 = vmatpush.msra.mxu0 0.0
    %1291 = vmatpush.msra.mxu0 0.0
    %1292 = vmatpush.msra.mxu0 0.0
    %1293 = vmatpush.msra.mxu0 0.0
    %1294 = vmatpush.msra.mxu0 0.0
    %1295 = vmatpush.msra.mxu0 0.0
    %1296 = vmatpush.msra.mxu0 0.0
    %1297 = vmatpush.msra.mxu0 0.0
    %1298 = vmatpush.msra.mxu0 0.0
    %1299 = vmatpush.msra.mxu0 0.0
    %1300 = vmatpush.msra.mxu0 0.0
    %1301 = vmatpush.msra.mxu0 0.0
    %1302 = vmatpush.msra.mxu0 %v1282
    %1303 = vmatpush.msra.mxu0 %v1280
    %1304 = vmatmul.f32.gmra.mxu0 %v1286
    %v1305 = vpop.f32.mrf.mxu0
    %v1306 = vadd.f32 0.0, %v1305
    %1307 = vdwg.mxu0
    %1308 = vrot.lane.b32.xlu0 %v141, 104
    %v1309 = vpop.permute.xlu0 %1308
    %1310 = vrot.lane.b32.xlu0 %v144, 104
    %v1311 = vpop.permute.xlu0 %1310
    %v1315 = vsel %vm294, %v1220, 0
    %1317 = vmatpush.msra.mxu0 0.0
    %1318 = vmatpush.msra.mxu0 0.0
    %1319 = vmatpush.msra.mxu0 0.0
    %1320 = vmatpush.msra.mxu0 0.0
    %1321 = vmatpush.msra.mxu0 0.0
    %1322 = vmatpush.msra.mxu0 0.0
    %1323 = vmatpush.msra.mxu0 0.0
    %1324 = vmatpush.msra.mxu0 0.0
    %1325 = vmatpush.msra.mxu0 0.0
    %1326 = vmatpush.msra.mxu0 0.0
    %1327 = vmatpush.msra.mxu0 0.0
    %1328 = vmatpush.msra.mxu0 0.0
    %1329 = vmatpush.msra.mxu0 0.0
    %1330 = vmatpush.msra.mxu0 0.0
    %1331 = vmatpush.msra.mxu0 %v1311
    %1332 = vmatpush.msra.mxu0 %v1309
    %1333 = vmatmul.f32.gmra.mxu0 %v1315
    %v1334 = vpop.f32.mrf.mxu0
    %v1335 = vadd.f32 0.0, %v1334
    %1336 = vdwg.mxu0
    %1341 = vrot.lane.b32.xlu0 %v1248, 24
    %v1342 = vpop.permute.xlu0 %1341
    %1343 = vrot.lane.b32.xlu0 %v1277, 24
    %v1344 = vpop.permute.xlu0 %1343
    %1345 = vrot.lane.b32.xlu0 %v1306, 24
    %v1346 = vpop.permute.xlu0 %1345
    %1347 = vrot.lane.b32.xlu0 %v1335, 24
    %v1348 = vpop.permute.xlu0 %1347
    %vm1353 = vcmask 261312
    %1354 = vst.msk [vmem:[#allocation2] sm:$0xff] %vm1353, %v1342
    %1355 = vst.msk [vmem:[#allocation2 + $0x8] sm:$0xff] %vm1353, %v1344
    %1356 = vst.msk [vmem:[#allocation2 + $0x10] sm:$0xff] %vm1353, %v1346
    %1357 = vst.msk [vmem:[#allocation2 + $0x18] sm:$0xff] %vm1353, %v1348
    %v1358 = vld [vmem:[#allocation2] sm:$0xff]
    %v1359 = vld [vmem:[#allocation2 + $0x8] sm:$0xff]
    %v1360 = vld [vmem:[#allocation2 + $0x10] sm:$0xff]
    %v1361 = vld [vmem:[#allocation2 + $0x18] sm:$0xff]
    %v1362 = vld [vmem:[%s5] sm:$0xff]
    %v1363 = vld [vmem:[%s5 + $0x8] sm:$0xff]
    %v1364 = vld [vmem:[%s5 + $0x10] sm:$0xff]
    %v1365 = vld [vmem:[%s5 + $0x18] sm:$0xff]
    %v1366 = vld [vmem:[%s6] sm:$0x1]
    %v1368 = vperm.slane %v1366, 0
    %v1371 = vsel %vm150, %v1358, 0
    %v1374 = vsel %vm150, %v1359, 0
    %v1377 = vsel %vm150, %v1360, 0
    %v1380 = vsel %vm150, %v1361, 0
    %1382 = vmatpush.msra.mxu0 0.0
    %1383 = vmatpush.msra.mxu0 0.0
    %1384 = vmatpush.msra.mxu0 0.0
    %1385 = vmatpush.msra.mxu0 0.0
    %1386 = vmatpush.msra.mxu0 0.0
    %1387 = vmatpush.msra.mxu0 0.0
    %1388 = vmatpush.msra.mxu0 0.0
    %1389 = vmatpush.msra.mxu0 0.0
    %1390 = vmatpush.msra.mxu0 0.0
    %1391 = vmatpush.msra.mxu0 0.0
    %1392 = vmatpush.msra.mxu0 0.0
    %1393 = vmatpush.msra.mxu0 0.0
    %1394 = vmatpush.msra.mxu0 %v1365
    %1395 = vmatpush.msra.mxu0 %v1364
    %1396 = vmatpush.msra.mxu0 %v1363
    %1397 = vmatpush.msra.mxu0 %v1362
    %1398 = vmatmul.f32.gmra.mxu0 %v1371
    %v1399 = vpop.f32.mrf.mxu0
    %v1400 = vadd.f32 %v1368, %v1399
    %1401 = vmatmul.f32.gmra.mxu0 %v1374
    %v1402 = vpop.f32.mrf.mxu0
    %v1403 = vadd.f32 %v1368, %v1402
    %1404 = vmatmul.f32.gmra.mxu0 %v1377
    %v1405 = vpop.f32.mrf.mxu0
    %v1406 = vadd.f32 %v1368, %v1405
    %1407 = vmatmul.f32.gmra.mxu0 %v1380
    %v1408 = vpop.f32.mrf.mxu0
    %v1409 = vadd.f32 %v1368, %v1408
    %1410 = vdwg.mxu0
    %1411 = vst.msk [vmem:[#allocation3] sm:$0xff] %vm150, %v1400
    %1412 = vst.msk [vmem:[#allocation3 + $0x8] sm:$0xff] %vm150, %v1403
    %1413 = vst.msk [vmem:[#allocation3 + $0x10] sm:$0xff] %vm150, %v1406
    %1414 = vst.msk [vmem:[#allocation3 + $0x18] sm:$0xff] %vm150, %v1409
    // Predicated region
    $region30: #{tpu_custom_call.1} parent=1 // pred_check
      _
    $region31: #{tpu_custom_call.1} parent=1 // pred_check_branch
      %1416 = sbr.rel (0) target = $region33
    $region32: #{tpu_custom_call.1} parent=1 // pred_region
      %1418 = vsyncadd [#allocation4], 0
      %s1419 = sshll.u32 [#allocation3], 4
      %s1420 = int_to_ptr.vmem [resolvable:$true] %s1419
      %s1421 = sshll.u32 %s7, 4
      %s1422 = int_to_ptr.hbm [resolvable:$true] %s1421
      %1427 = dma.vmem_to_hbm [thread:$0]  %s1420, 512, %s1422, [#allocation4], 128, 128, 8
    $region33: #{tpu_custom_call.1} parent=1 // pred_fallthru
      _
    // Predicated region
    $region34: #{tpu_custom_call.1} parent=1 // pred_check
      _
    $region35: #{tpu_custom_call.1} parent=1 // pred_check_branch
      %1429 = sbr.rel (0) target = $region37
    $region36: #{tpu_custom_call.1} parent=1 // pred_region
      %1431 = dma.done [#allocation4], 512
    $region37: #{tpu_custom_call.1} parent=1 // pred_fallthru
      _
    %1432 = vsyncpa [#allocation4], 1

</llo_original>
